<compile_context>
chip_gen: v7x
topology: tpu7x:2x2x1
jax: 0.10.0
libtpu: 0.0.40
codegen_flags: <defaults>
</compile_context>

<pallas_src>
import math
from functools import partial

import jax
import jax.numpy as jnp
import numpy as np
from jax.experimental import pallas as pl
from jax.experimental.pallas import tpu as pltpu


# -----------------------------------------------------------------------------
# Kernel: grid = (layer, batch).  One grid step = one EncoderBlock applied to
# one batch element.  Weights are fetched once per layer (layer is the outer
# axis); the residual stream for all batch elements is resident in o_ref.
# -----------------------------------------------------------------------------
def encoder_kernel(
    x_ref,                                    # (B, N, D)      input activations (resident)
    vecD_ref,                                 # (8, D)   f32   [ln1_w,ln1_b,bo,ls1,ln2_w,ln2_b,b2,ls2]
    bqkv_ref,                                 # (3, H, Dh) f32 q/k/v biases, head-shaped
    b1_ref,                                   # (1, mlp) f32   MLP first bias
    wq_ref, wk_ref, wv_ref,                   # (H, D, Dh) bf16
    wo_ref,                                   # (H, Dh, D) bf16
    w1_ref,                                   # (D, mlp)  bf16
    w2_ref,                                   # (mlp, D)  bf16
    o_ref,                                    # (B, N, D) f32  output == resident residual stream
    *,
    num_heads: int,
):
    l = pl.program_id(0)
    b = pl.program_id(1)

    B, N, D = o_ref.shape
    H = num_heads
    Dh = D // H
    scale = 1.0 / math.sqrt(Dh)
    eps = 1e-6  # matches nn.LayerNorm(hidden_dim, eps=1e-06) in the module

    # Initialize the resident residual stream from the input at the first layer.
    @pl.when(l == 0)
    def _():
        o_ref[b] = x_ref[b]

    x = o_ref[b].astype(jnp.float32)                                   # (N, D)

    vec = vecD_ref[...]                                                # (8, D)
    ln1_w, ln1_b, bo, ls1 = vec[0:1], vec[1:2], vec[2:3], vec[3:4]
    ln2_w, ln2_b, b2, ls2 = vec[4:5], vec[5:6], vec[6:7], vec[7:8]

    bqkv = bqkv_ref[...]                                               # (3, H, Dh)
    bq = bqkv[0][:, None, :]                                           # (H, 1, Dh)
    bk = bqkv[1][:, None, :]
    bv = bqkv[2][:, None, :]

    def layer_norm(z, w, bias):
        # Single-pass reduction: var = E[z^2] - E[z]^2 (fused, halves XLU work).
        mu = jnp.mean(z, axis=-1, keepdims=True)
        mu2 = jnp.mean(z * z, axis=-1, keepdims=True)
        var = mu2 - mu * mu
        return (z - mu) * jax.lax.rsqrt(var + eps) * w + bias

    # ---- branch 1: LN1 + multi-head self-attention ---------------------------
    h1 = layer_norm(x, ln1_w, ln1_b).astype(jnp.bfloat16)              # (N, D)
    h1h = jnp.broadcast_to(h1[None], (H, N, D))                        # (H, N, D)

    # Head-batched projections: no per-head slicing / stacking.
    q = jnp.einsum("hnd,hde->hne", h1h, wq_ref[...],
                   preferred_element_type=jnp.float32) + bq            # (H, N, Dh)
    k = jnp.einsum("hnd,hde->hne", h1h, wk_ref[...],
                   preferred_element_type=jnp.float32) + bk
    v = jnp.einsum("hnd,hde->hne", h1h, wv_ref[...],
                   preferred_element_type=jnp.float32) + bv

    s = jnp.einsum("hqe,hke->hqk", q.astype(jnp.bfloat16), k.astype(jnp.bfloat16),
                   preferred_element_type=jnp.float32) * scale         # (H, N, N)
    s = s - jnp.max(s, axis=-1, keepdims=True)
    p = jnp.exp(s)
    # approx reciprocal (EUP): inference-grade precision (documented).
    p = p * pl.reciprocal(jnp.sum(p, axis=-1, keepdims=True), approx=True)

    oh = jnp.einsum("hqk,hke->hqe", p.astype(jnp.bfloat16), v.astype(jnp.bfloat16),
                    preferred_element_type=jnp.float32)                # (H, N, Dh)

    # Head merge folded into the output projection: per-head (N,Dh)x(Dh,D)
    # matmuls summed over heads (no lane concat).
    attn_h = jnp.einsum("hne,hed->hnd", oh.astype(jnp.bfloat16), wo_ref[...],
                        preferred_element_type=jnp.float32)            # (H, N, D)
    attn = jnp.sum(attn_h, axis=0) + bo                                # (N, D)

    br1 = attn * ls1 + x                                               # layer_scale_1 + residual

    # ---- branch 2: LN2 + MLP (exact GELU, as in nn.GELU default) -------------
    h2 = layer_norm(br1, ln2_w, ln2_b).astype(jnp.bfloat16)
    m = jnp.dot(h2, w1_ref[...], preferred_element_type=jnp.float32) + b1_ref[...]
    # TODO(synk): exact erf is kept to match nn.GELU(); tanh-approx would route
    # to the (idle) EUP slot and help VALU-bound v5e if precision allows.
    m = 0.5 * m * (1.0 + jax.lax.erf(m * (1.0 / math.sqrt(2.0))))
    m = jnp.dot(m.astype(jnp.bfloat16), w2_ref[...],
                preferred_element_type=jnp.float32) + b2

    o_ref[b] = (m * ls2 + br1).astype(o_ref.dtype)                     # layer_scale_2 + residual


# -----------------------------------------------------------------------------
# Wrapper: one pallas_call for the whole encoder
# -----------------------------------------------------------------------------
_PARAM_ORDER = ("vecD", "bqkvh", "b1", "wq", "wk", "wv", "wo", "w1", "w2")


def _pick_vmem_limit():
    """~75% of physical VMEM: ~96 MiB on v5e/v6e (128 MiB), ~48 MiB on v7x (64 MiB)."""
    cap = 64 * 1024 * 1024
    try:
        cap = int(pltpu.get_tpu_info().vmem_capacity_bytes)
    except Exception:
        pass
    return min(int(cap * 3 // 4), 112 * 1024 * 1024)


def encoder_forward(x, packed, num_heads):
    """x: [B, N, D] activations.  packed: layer-stacked, pre-shaped params."""
    B, N, D = x.shape
    L = packed["w1"].shape[0]
    plist = [packed[name] for name in _PARAM_ORDER]

    def layer_spec(a):
        nd = a.ndim - 1
        # Index depends only on `l` (outer axis) -> one weight DMA per layer.
        return pl.BlockSpec((None,) + a.shape[1:],
                            lambda l, b, _nd=nd: (l,) + (0,) * _nd)

    # Constant index maps: the (B, N, D) blocks stay VMEM-resident for the
    # whole grid; the output doubles as the f32 residual-stream accumulator.
    resident = pl.BlockSpec((B, N, D), lambda l, b: (0, 0, 0))

    return pl.pallas_call(
        partial(encoder_kernel, num_heads=num_heads),
        out_shape=jax.ShapeDtypeStruct((B, N, D), x.dtype),
        grid=(L, B),
        in_specs=[resident] + [layer_spec(a) for a in plist],
        out_specs=resident,
        input_output_aliases={0: 0},  # donate x; caller must not reuse x afterwards
        compiler_params=pltpu.CompilerParams(
            dimension_semantics=("arbitrary", "arbitrary"),
            vmem_limit_bytes=_pick_vmem_limit(),
        ),
    )(x, *plist)


# -----------------------------------------------------------------------------
# Parameter creation (PyTorch layout) + host-side packing for the kernel
# -----------------------------------------------------------------------------
def make_block_params(key, D, mlp_dim, layer_scale_init_value):
    """Per-layer parameters in PyTorch layout (used by the pure-JAX reference)."""
    ks = jax.random.split(key, 8)
    s = 0.02
    return {
        "ln1_w": jnp.ones((D,), jnp.float32),
        "ln1_b": jnp.zeros((D,), jnp.float32),
        "wqkv": (jax.random.normal(ks[0], (3 * D, D)) * s).astype(jnp.float32),
        "bqkv": (jax.random.normal(ks[1], (3 * D,)) * s).astype(jnp.float32),
        "wo":   (jax.random.normal(ks[2], (D, D)) * s).astype(jnp.float32),
        "bo":   (jax.random.normal(ks[3], (D,)) * s).astype(jnp.float32),
        "ls1":  jnp.full((D,), layer_scale_init_value, jnp.float32),
        "ln2_w": jnp.ones((D,), jnp.float32),
        "ln2_b": jnp.zeros((D,), jnp.float32),
        "w1":   (jax.random.normal(ks[4], (mlp_dim, D)) * s).astype(jnp.float32),
        "b1":   (jax.random.normal(ks[5], (mlp_dim,)) * s).astype(jnp.float32),
        "w2":   (jax.random.normal(ks[6], (D, mlp_dim)) * s).astype(jnp.float32),
        "b2":   (jax.random.normal(ks[7], (D,)) * s).astype(jnp.float32),
        "ls2":  jnp.full((D,), layer_scale_init_value, jnp.float32),
    }


def pack_encoder_params(layer_params, num_heads):
    """Stack per-layer params over L, pre-shape matmul weights for the kernel:
       wq/wk/wv -> (H, D, Dh), wo -> (H, Dh, D), w1 -> (D, mlp), w2 -> (mlp, D).
       Big matmul weights cast to bf16 (f32 accumulation in the kernel); small
       vectors packed into (8, D) / (3, H, Dh) f32 blocks."""
    H = num_heads
    D = layer_params[0]["ln1_w"].shape[0]
    Dh = D // H

    def stk(fn, dtype=None):
        a = jnp.stack([fn(p) for p in layer_params], axis=0)
        return a.astype(dtype) if dtype is not None else a

    def head_w(w_rows):       # w_rows: (D_out=H*Dh, D_in) torch layout -> (H, D_in, Dh)
        return w_rows.T.reshape(D, H, Dh).transpose(1, 0, 2)

    return {
        "vecD": stk(lambda p: jnp.stack(
            [p["ln1_w"], p["ln1_b"], p["bo"], p["ls1"],
             p["ln2_w"], p["ln2_b"], p["b2"], p["ls2"]], axis=0)),        # (L, 8, D)
        "bqkvh": stk(lambda p: p["bqkv"].reshape(3, H, Dh)),              # (L, 3, H, Dh)
        "b1":   stk(lambda p: p["b1"][None, :]),                          # (L, 1, mlp)
        "wq":   stk(lambda p: head_w(p["wqkv"][:D]), jnp.bfloat16),       # (L, H, D, Dh)
        "wk":   stk(lambda p: head_w(p["wqkv"][D:2 * D]), jnp.bfloat16),  # (L, H, D, Dh)
        "wv":   stk(lambda p: head_w(p["wqkv"][2 * D:]), jnp.bfloat16),   # (L, H, D, Dh)
        "wo":   stk(lambda p: p["wo"].T.reshape(H, Dh, D), jnp.bfloat16), # (L, H, Dh, D)
        "w1":   stk(lambda p: p["w1"].T, jnp.bfloat16),                   # (L, D, mlp)
        "w2":   stk(lambda p: p["w2"].T, jnp.bfloat16),                   # (L, mlp, D)
    }


# -----------------------------------------------------------------------------
# Pure-JAX f32 reference (mirrors PyTorch semantics) for correctness check
# -----------------------------------------------------------------------------
def block_ref(x, p, H):
    B, N, D = x.shape
    Dh = D // H

    def ln(z, w, b):
        mu = z.mean(-1, keepdims=True)
        var = ((z - mu) ** 2).mean(-1, keepdims=True)
        return (z - mu) / jnp.sqrt(var + 1e-6) * w + b

    h = ln(x, p["ln1_w"], p["ln1_b"])
    qkv = h @ p["wqkv"].T + p["bqkv"]
    q, k, v = jnp.split(qkv, 3, axis=-1)
    q = q.reshape(B, N, H, Dh).transpose(0, 2, 1, 3)
    k = k.reshape(B, N, H, Dh).transpose(0, 2, 1, 3)
    v = v.reshape(B, N, H, Dh).transpose(0, 2, 1, 3)
    s = (q @ k.transpose(0, 1, 3, 2)) / math.sqrt(Dh)
    a = jax.nn.softmax(s, axis=-1)
    o = (a @ v).transpose(0, 2, 1, 3).reshape(B, N, D)
    o = o @ p["wo"].T + p["bo"]
    br1 = o * p["ls1"] + x
    h2 = ln(br1, p["ln2_w"], p["ln2_b"])
    m = h2 @ p["w1"].T + p["b1"]
    m = jax.nn.gelu(m, approximate=False)
    m = m @ p["w2"].T + p["b2"]
    return m * p["ls2"] + br1


def encoder_ref(x, layer_params, H):
    for p in layer_params:
        x = block_ref(x, p, H)
    return x


if __name__ == "__main__":
    # Small ViT-like config: num_layers=2, num_heads=4, hidden_dim=32, mlp_dim=64
    B, N, D = 2, 8, 32
    num_layers, num_heads, mlp_dim = 2, 4, 64
    layer_scale_init_value = 0.1

    key = jax.random.PRNGKey(0)
    kx, kp = jax.random.split(key)
    x = jax.random.normal(kx, (B, N, D), jnp.float32)

    pkeys = jax.random.split(kp, num_layers)
    layer_params = [make_block_params(pkeys[i], D, mlp_dim, layer_scale_init_value)
                    for i in range(num_layers)]
    packed = pack_encoder_params(layer_params, num_heads)

    # Reference first (f32, PyTorch-layout weights); x is donated to the kernel.
    ref = jax.block_until_ready(encoder_ref(x, layer_params, num_heads))

    encoder_jit = jax.jit(encoder_forward, static_argnums=(2,))
    out = jax.block_until_ready(encoder_jit(x, packed, num_heads))

    # bf16 matmul operands + approx softmax reciprocal -> relaxed tolerance.
    np.testing.assert_allclose(np.asarray(out), np.asarray(ref), rtol=2e-2, atol=2e-2)

    print("KERNEL_OK")
</pallas_src>

<mosaic_0001>
module attributes {stable_mosaic.version = 11 : i64} {
  func.func @encoder_kernel(%arg0: i32, %arg1: i32, %arg2: memref<2x8x32xf32, #tpu.memory_space<vmem>>, %arg3: memref<1x8x32xf32, #tpu.memory_space<vmem>>, %arg4: memref<1x3x4x8xf32, #tpu.memory_space<vmem>>, %arg5: memref<1x1x64xf32, #tpu.memory_space<vmem>>, %arg6: memref<1x4x32x8xbf16, #tpu.memory_space<vmem>>, %arg7: memref<1x4x32x8xbf16, #tpu.memory_space<vmem>>, %arg8: memref<1x4x32x8xbf16, #tpu.memory_space<vmem>>, %arg9: memref<1x4x8x32xbf16, #tpu.memory_space<vmem>>, %arg10: memref<1x32x64xbf16, #tpu.memory_space<vmem>>, %arg11: memref<1x64x32xbf16, #tpu.memory_space<vmem>>, %arg12: memref<2x8x32xf32, #tpu.memory_space<vmem>>) attributes {dimension_semantics = [#tpu.dimension_semantics<arbitrary>, #tpu.dimension_semantics<arbitrary>], iteration_bounds = array<i64: 2, 2>, scalar_prefetch = 0 : i64, scratch_operands = 0 : i64, tpu.core_type = #tpu.core_type<tc>, window_params = [{pipeline_mode = #tpu.pipeline_mode<synchronous>, transform_indices = @transform_0, window_bounds = array<i64: 2, 8, 32>}, {transform_indices = @transform_1, window_bounds = array<i64: 1, 8, 32>}, {transform_indices = @transform_2, window_bounds = array<i64: 1, 3, 4, 8>}, {transform_indices = @transform_3, window_bounds = array<i64: 1, 1, 64>}, {transform_indices = @transform_4, window_bounds = array<i64: 1, 4, 32, 8>}, {transform_indices = @transform_5, window_bounds = array<i64: 1, 4, 32, 8>}, {transform_indices = @transform_6, window_bounds = array<i64: 1, 4, 32, 8>}, {transform_indices = @transform_7, window_bounds = array<i64: 1, 4, 8, 32>}, {transform_indices = @transform_8, window_bounds = array<i64: 1, 32, 64>}, {transform_indices = @transform_9, window_bounds = array<i64: 1, 64, 32>}, {pipeline_mode = #tpu.pipeline_mode<synchronous>, transform_indices = @transform_10, window_bounds = array<i64: 2, 8, 32>}]} {
    %c0_i32 = arith.constant 0 : i32
    %0 = arith.cmpi eq, %arg0, %c0_i32 : i32
    %1 = arith.extui %0 : i1 to i32
    %c0_i32_0 = arith.constant 0 : i32
    %2 = arith.cmpi ne, %1, %c0_i32_0 : i32
    scf.if %2 {
      %147 = arith.index_cast %arg1 : i32 to index
      %c0_60 = arith.constant 0 : index
      %c0_61 = arith.constant 0 : index
      %148 = vector.load %arg2[%147, %c0_60, %c0_61] : memref<2x8x32xf32, #tpu.memory_space<vmem>>, vector<1x8x32xf32>
      %149 = vector.shape_cast %148 : vector<1x8x32xf32> to vector<8x32xf32>
      %150 = arith.index_cast %arg1 : i32 to index
      %c0_62 = arith.constant 0 : index
      %c0_63 = arith.constant 0 : index
      %151 = vector.load %arg12[%150, %c0_62, %c0_63] : memref<2x8x32xf32, #tpu.memory_space<vmem>>, vector<1x8x32xf32>
      %152 = vector.shape_cast %151 : vector<1x8x32xf32> to vector<8x32xf32>
      %153 = vector.shape_cast %149 : vector<8x32xf32> to vector<1x8x32xf32>
      tpu.vector_store %arg12[%150, %c0_62, %c0_63], %153 {strides = array<i32>} : memref<2x8x32xf32, #tpu.memory_space<vmem>>, vector<1x8x32xf32>,
    } else {
    }
    %3 = arith.index_cast %arg1 : i32 to index
    %c0 = arith.constant 0 : index
    %c0_1 = arith.constant 0 : index
    %4 = vector.load %arg12[%3, %c0, %c0_1] : memref<2x8x32xf32, #tpu.memory_space<vmem>>, vector<1x8x32xf32>
    %5 = vector.shape_cast %4 : vector<1x8x32xf32> to vector<8x32xf32>
    %c0_2 = arith.constant 0 : index
    %c0_3 = arith.constant 0 : index
    %c0_4 = arith.constant 0 : index
    %6 = vector.load %arg3[%c0_2, %c0_3, %c0_4] : memref<1x8x32xf32, #tpu.memory_space<vmem>>, vector<1x8x32xf32>
    %7 = vector.shape_cast %6 : vector<1x8x32xf32> to vector<8x32xf32>
    %8 = vector.extract_strided_slice %7 {offsets = [0, 0], sizes = [1, 32], strides = [1, 1]} : vector<8x32xf32> to vector<1x32xf32>
    %9 = vector.extract_strided_slice %7 {offsets = [1, 0], sizes = [1, 32], strides = [1, 1]} : vector<8x32xf32> to vector<1x32xf32>
    %10 = vector.extract_strided_slice %7 {offsets = [2, 0], sizes = [1, 32], strides = [1, 1]} : vector<8x32xf32> to vector<1x32xf32>
    %11 = vector.extract_strided_slice %7 {offsets = [3, 0], sizes = [1, 32], strides = [1, 1]} : vector<8x32xf32> to vector<1x32xf32>
    %12 = vector.extract_strided_slice %7 {offsets = [4, 0], sizes = [1, 32], strides = [1, 1]} : vector<8x32xf32> to vector<1x32xf32>
    %13 = vector.extract_strided_slice %7 {offsets = [5, 0], sizes = [1, 32], strides = [1, 1]} : vector<8x32xf32> to vector<1x32xf32>
    %14 = vector.extract_strided_slice %7 {offsets = [6, 0], sizes = [1, 32], strides = [1, 1]} : vector<8x32xf32> to vector<1x32xf32>
    %15 = vector.extract_strided_slice %7 {offsets = [7, 0], sizes = [1, 32], strides = [1, 1]} : vector<8x32xf32> to vector<1x32xf32>
    %c0_5 = arith.constant 0 : index
    %c0_6 = arith.constant 0 : index
    %c0_7 = arith.constant 0 : index
    %c0_8 = arith.constant 0 : index
    %16 = vector.load %arg4[%c0_5, %c0_6, %c0_7, %c0_8] : memref<1x3x4x8xf32, #tpu.memory_space<vmem>>, vector<1x3x4x8xf32>
    %17 = vector.shape_cast %16 : vector<1x3x4x8xf32> to vector<3x4x8xf32>
    %18 = vector.extract_strided_slice %17 {offsets = [0, 0, 0], sizes = [1, 4, 8], strides = [1, 1, 1]} : vector<3x4x8xf32> to vector<1x4x8xf32>
    %19 = vector.shape_cast %18 : vector<1x4x8xf32> to vector<4x8xf32>
    %20 = vector.shape_cast %19 : vector<4x8xf32> to vector<4x1x8xf32>
    %21 = vector.extract_strided_slice %17 {offsets = [1, 0, 0], sizes = [1, 4, 8], strides = [1, 1, 1]} : vector<3x4x8xf32> to vector<1x4x8xf32>
    %22 = vector.shape_cast %21 : vector<1x4x8xf32> to vector<4x8xf32>
    %23 = vector.shape_cast %22 : vector<4x8xf32> to vector<4x1x8xf32>
    %24 = vector.extract_strided_slice %17 {offsets = [2, 0, 0], sizes = [1, 4, 8], strides = [1, 1, 1]} : vector<3x4x8xf32> to vector<1x4x8xf32>
    %25 = vector.shape_cast %24 : vector<1x4x8xf32> to vector<4x8xf32>
    %26 = vector.shape_cast %25 : vector<4x8xf32> to vector<4x1x8xf32>
    %cst = arith.constant dense<0.000000e+00> : vector<8xf32>
    %27 = vector.multi_reduction <add>, %5, %cst [1] : vector<8x32xf32> to vector<8xf32>
    %28 = vector.shape_cast %27 : vector<8xf32> to vector<8x1xf32>
    %cst_9 = arith.constant 3.200000e+01 : f32
    %29 = vector.broadcast %cst_9 : f32 to vector<8x1xf32>
    %30 = arith.divf %28, %29 : vector<8x1xf32>
    %31 = arith.mulf %5, %5 : vector<8x32xf32>
    %cst_10 = arith.constant dense<0.000000e+00> : vector<8xf32>
    %32 = vector.multi_reduction <add>, %31, %cst_10 [1] : vector<8x32xf32> to vector<8xf32>
    %33 = vector.shape_cast %32 : vector<8xf32> to vector<8x1xf32>
    %cst_11 = arith.constant 3.200000e+01 : f32
    %34 = vector.broadcast %cst_11 : f32 to vector<8x1xf32>
    %35 = arith.divf %33, %34 : vector<8x1xf32>
    %36 = arith.mulf %30, %30 : vector<8x1xf32>
    %37 = arith.subf %35, %36 : vector<8x1xf32>
    %38 = vector.broadcast %30 : vector<8x1xf32> to vector<8x32xf32>
    %39 = arith.subf %5, %38 : vector<8x32xf32>
    %cst_12 = arith.constant 9.99999997E-7 : f32
    %40 = vector.broadcast %cst_12 : f32 to vector<8x1xf32>
    %41 = arith.addf %37, %40 : vector<8x1xf32>
    %42 = math.rsqrt %41 : vector<8x1xf32>
    %43 = vector.broadcast %42 : vector<8x1xf32> to vector<8x32xf32>
    %44 = arith.mulf %39, %43 : vector<8x32xf32>
    %45 = vector.broadcast %8 : vector<1x32xf32> to vector<8x32xf32>
    %46 = arith.mulf %44, %45 : vector<8x32xf32>
    %47 = vector.broadcast %9 : vector<1x32xf32> to vector<8x32xf32>
    %48 = arith.addf %46, %47 : vector<8x32xf32>
    %49 = arith.truncf %48 : vector<8x32xf32> to vector<8x32xbf16>
    %50 = vector.shape_cast %49 : vector<8x32xbf16> to vector<1x8x32xbf16>
    %51 = vector.shape_cast %50 : vector<1x8x32xbf16> to vector<1x8x32xbf16>
    %52 = vector.broadcast %51 : vector<1x8x32xbf16> to vector<4x8x32xbf16>
    %c0_13 = arith.constant 0 : index
    %c0_14 = arith.constant 0 : index
    %c0_15 = arith.constant 0 : index
    %c0_16 = arith.constant 0 : index
    %53 = vector.load %arg6[%c0_13, %c0_14, %c0_15, %c0_16] : memref<1x4x32x8xbf16, #tpu.memory_space<vmem>>, vector<1x4x32x8xbf16>
    %54 = vector.shape_cast %53 : vector<1x4x32x8xbf16> to vector<4x32x8xbf16>
    "tpu.trace_start"() <{level = 10 : i32, message = "hnd,hde->hne"}> : () -> ()
    %cst_17 = arith.constant dense<0.000000e+00> : vector<4x8x8xf32>
    %55 = tpu.matmul %52, %54, %cst_17 {dimension_numbers = #tpu.dot_dimension_numbers<[2], [1], [1], [2], [0, 0, 0, 1, 1, 2], [0], [0]>} : vector<4x8x32xbf16>, vector<4x32x8xbf16>, vector<4x8x8xf32> -> vector<4x8x8xf32>
    "tpu.trace_stop"() : () -> ()
    %56 = vector.broadcast %20 : vector<4x1x8xf32> to vector<4x8x8xf32>
    %57 = arith.addf %55, %56 : vector<4x8x8xf32>
    %c0_18 = arith.constant 0 : index
    %c0_19 = arith.constant 0 : index
    %c0_20 = arith.constant 0 : index
    %c0_21 = arith.constant 0 : index
    %58 = vector.load %arg7[%c0_18, %c0_19, %c0_20, %c0_21] : memref<1x4x32x8xbf16, #tpu.memory_space<vmem>>, vector<1x4x32x8xbf16>
    %59 = vector.shape_cast %58 : vector<1x4x32x8xbf16> to vector<4x32x8xbf16>
    "tpu.trace_start"() <{level = 10 : i32, message = "hnd,hde->hne"}> : () -> ()
    %cst_22 = arith.constant dense<0.000000e+00> : vector<4x8x8xf32>
    %60 = tpu.matmul %52, %59, %cst_22 {dimension_numbers = #tpu.dot_dimension_numbers<[2], [1], [1], [2], [0, 0, 0, 1, 1, 2], [0], [0]>} : vector<4x8x32xbf16>, vector<4x32x8xbf16>, vector<4x8x8xf32> -> vector<4x8x8xf32>
    "tpu.trace_stop"() : () -> ()
    %61 = vector.broadcast %23 : vector<4x1x8xf32> to vector<4x8x8xf32>
    %62 = arith.addf %60, %61 : vector<4x8x8xf32>
    %c0_23 = arith.constant 0 : index
    %c0_24 = arith.constant 0 : index
    %c0_25 = arith.constant 0 : index
    %c0_26 = arith.constant 0 : index
    %63 = vector.load %arg8[%c0_23, %c0_24, %c0_25, %c0_26] : memref<1x4x32x8xbf16, #tpu.memory_space<vmem>>, vector<1x4x32x8xbf16>
    %64 = vector.shape_cast %63 : vector<1x4x32x8xbf16> to vector<4x32x8xbf16>
    "tpu.trace_start"() <{level = 10 : i32, message = "hnd,hde->hne"}> : () -> ()
    %cst_27 = arith.constant dense<0.000000e+00> : vector<4x8x8xf32>
    %65 = tpu.matmul %52, %64, %cst_27 {dimension_numbers = #tpu.dot_dimension_numbers<[2], [1], [1], [2], [0, 0, 0, 1, 1, 2], [0], [0]>} : vector<4x8x32xbf16>, vector<4x32x8xbf16>, vector<4x8x8xf32> -> vector<4x8x8xf32>
    "tpu.trace_stop"() : () -> ()
    %66 = vector.broadcast %26 : vector<4x1x8xf32> to vector<4x8x8xf32>
    %67 = arith.addf %65, %66 : vector<4x8x8xf32>
    %68 = arith.truncf %57 : vector<4x8x8xf32> to vector<4x8x8xbf16>
    %69 = arith.truncf %62 : vector<4x8x8xf32> to vector<4x8x8xbf16>
    "tpu.trace_start"() <{level = 10 : i32, message = "hqe,hke->hqk"}> : () -> ()
    %cst_28 = arith.constant dense<0.000000e+00> : vector<4x8x8xf32>
    %70 = tpu.matmul %68, %69, %cst_28 {dimension_numbers = #tpu.dot_dimension_numbers<[2], [2], [1], [1], [0, 0, 0, 1, 1, 1], [0], [0]>} : vector<4x8x8xbf16>, vector<4x8x8xbf16>, vector<4x8x8xf32> -> vector<4x8x8xf32>
    "tpu.trace_stop"() : () -> ()
    %cst_29 = arith.constant 0.353553385 : f32
    %71 = vector.broadcast %cst_29 : f32 to vector<4x8x8xf32>
    %72 = arith.mulf %70, %71 : vector<4x8x8xf32>
    %cst_30 = arith.constant dense<0xFF800000> : vector<4x8xf32>
    %73 = vector.multi_reduction <maximumf>, %72, %cst_30 [2] : vector<4x8x8xf32> to vector<4x8xf32>
    %74 = vector.shape_cast %73 : vector<4x8xf32> to vector<4x8x1xf32>
    %75 = vector.broadcast %74 : vector<4x8x1xf32> to vector<4x8x8xf32>
    %76 = arith.subf %72, %75 : vector<4x8x8xf32>
    %77 = math.exp %76 : vector<4x8x8xf32>
    %cst_31 = arith.constant dense<0.000000e+00> : vector<4x8xf32>
    %78 = vector.multi_reduction <add>, %77, %cst_31 [2] : vector<4x8x8xf32> to vector<4x8xf32>
    %79 = vector.shape_cast %78 : vector<4x8xf32> to vector<4x8x1xf32>
    %80 = tpu.reciprocal %79 {approx = true} : vector<4x8x1xf32> -> vector<4x8x1xf32>
    %81 = vector.broadcast %80 : vector<4x8x1xf32> to vector<4x8x8xf32>
    %82 = arith.mulf %77, %81 : vector<4x8x8xf32>
    %83 = arith.truncf %82 : vector<4x8x8xf32> to vector<4x8x8xbf16>
    %84 = arith.truncf %67 : vector<4x8x8xf32> to vector<4x8x8xbf16>
    "tpu.trace_start"() <{level = 10 : i32, message = "hqk,hke->hqe"}> : () -> ()
    %cst_32 = arith.constant dense<0.000000e+00> : vector<4x8x8xf32>
    %85 = tpu.matmul %83, %84, %cst_32 {dimension_numbers = #tpu.dot_dimension_numbers<[2], [1], [1], [2], [0, 0, 0, 1, 1, 2], [0], [0]>} : vector<4x8x8xbf16>, vector<4x8x8xbf16>, vector<4x8x8xf32> -> vector<4x8x8xf32>
    "tpu.trace_stop"() : () -> ()
    %86 = arith.truncf %85 : vector<4x8x8xf32> to vector<4x8x8xbf16>
    %c0_33 = arith.constant 0 : index
    %c0_34 = arith.constant 0 : index
    %c0_35 = arith.constant 0 : index
    %c0_36 = arith.constant 0 : index
    %87 = vector.load %arg9[%c0_33, %c0_34, %c0_35, %c0_36] : memref<1x4x8x32xbf16, #tpu.memory_space<vmem>>, vector<1x4x8x32xbf16>
    %88 = vector.shape_cast %87 : vector<1x4x8x32xbf16> to vector<4x8x32xbf16>
    "tpu.trace_start"() <{level = 10 : i32, message = "hne,hed->hnd"}> : () -> ()
    %cst_37 = arith.constant dense<0.000000e+00> : vector<4x8x32xf32>
    %89 = tpu.matmul %86, %88, %cst_37 {dimension_numbers = #tpu.dot_dimension_numbers<[2], [1], [1], [2], [0, 0, 0, 1, 1, 2], [0], [0]>} : vector<4x8x8xbf16>, vector<4x8x32xbf16>, vector<4x8x32xf32> -> vector<4x8x32xf32>
    "tpu.trace_stop"() : () -> ()
    %cst_38 = arith.constant dense<0.000000e+00> : vector<8x32xf32>
    %90 = vector.multi_reduction <add>, %89, %cst_38 [0] : vector<4x8x32xf32> to vector<8x32xf32>
    %91 = vector.broadcast %10 : vector<1x32xf32> to vector<8x32xf32>
    %92 = arith.addf %90, %91 : vector<8x32xf32>
    %93 = vector.broadcast %11 : vector<1x32xf32> to vector<8x32xf32>
    %94 = arith.mulf %92, %93 : vector<8x32xf32>
    %95 = arith.addf %94, %5 : vector<8x32xf32>
    %cst_39 = arith.constant dense<0.000000e+00> : vector<8xf32>
    %96 = vector.multi_reduction <add>, %95, %cst_39 [1] : vector<8x32xf32> to vector<8xf32>
    %97 = vector.shape_cast %96 : vector<8xf32> to vector<8x1xf32>
    %cst_40 = arith.constant 3.200000e+01 : f32
    %98 = vector.broadcast %cst_40 : f32 to vector<8x1xf32>
    %99 = arith.divf %97, %98 : vector<8x1xf32>
    %100 = arith.mulf %95, %95 : vector<8x32xf32>
    %cst_41 = arith.constant dense<0.000000e+00> : vector<8xf32>
    %101 = vector.multi_reduction <add>, %100, %cst_41 [1] : vector<8x32xf32> to vector<8xf32>
    %102 = vector.shape_cast %101 : vector<8xf32> to vector<8x1xf32>
    %cst_42 = arith.constant 3.200000e+01 : f32
    %103 = vector.broadcast %cst_42 : f32 to vector<8x1xf32>
    %104 = arith.divf %102, %103 : vector<8x1xf32>
    %105 = arith.mulf %99, %99 : vector<8x1xf32>
    %106 = arith.subf %104, %105 : vector<8x1xf32>
    %107 = vector.broadcast %99 : vector<8x1xf32> to vector<8x32xf32>
    %108 = arith.subf %95, %107 : vector<8x32xf32>
    %cst_43 = arith.constant 9.99999997E-7 : f32
    %109 = vector.broadcast %cst_43 : f32 to vector<8x1xf32>
    %110 = arith.addf %106, %109 : vector<8x1xf32>
    %111 = math.rsqrt %110 : vector<8x1xf32>
    %112 = vector.broadcast %111 : vector<8x1xf32> to vector<8x32xf32>
    %113 = arith.mulf %108, %112 : vector<8x32xf32>
    %114 = vector.broadcast %12 : vector<1x32xf32> to vector<8x32xf32>
    %115 = arith.mulf %113, %114 : vector<8x32xf32>
    %116 = vector.broadcast %13 : vector<1x32xf32> to vector<8x32xf32>
    %117 = arith.addf %115, %116 : vector<8x32xf32>
    %118 = arith.truncf %117 : vector<8x32xf32> to vector<8x32xbf16>
    %c0_44 = arith.constant 0 : index
    %c0_45 = arith.constant 0 : index
    %c0_46 = arith.constant 0 : index
    %119 = vector.load %arg10[%c0_44, %c0_45, %c0_46] : memref<1x32x64xbf16, #tpu.memory_space<vmem>>, vector<1x32x64xbf16>
    %120 = vector.shape_cast %119 : vector<1x32x64xbf16> to vector<32x64xbf16>
    %cst_47 = arith.constant dense<0.000000e+00> : vector<8x64xf32>
    %121 = tpu.matmul %118, %120, %cst_47 {dimension_numbers = #tpu.dot_dimension_numbers<[1], [0], [0], [1], [0, 0, 1, 1], [], []>} : vector<8x32xbf16>, vector<32x64xbf16>, vector<8x64xf32> -> vector<8x64xf32>
    %c0_48 = arith.constant 0 : index
    %c0_49 = arith.constant 0 : index
    %c0_50 = arith.constant 0 : index
    %122 = vector.load %arg5[%c0_48, %c0_49, %c0_50] : memref<1x1x64xf32, #tpu.memory_space<vmem>>, vector<1x1x64xf32>
    %123 = vector.shape_cast %122 : vector<1x1x64xf32> to vector<1x64xf32>
    %124 = vector.broadcast %123 : vector<1x64xf32> to vector<8x64xf32>
    %125 = arith.addf %121, %124 : vector<8x64xf32>
    %cst_51 = arith.constant 5.000000e-01 : f32
    %126 = vector.broadcast %cst_51 : f32 to vector<8x64xf32>
    %127 = arith.mulf %126, %125 : vector<8x64xf32>
    %cst_52 = arith.constant 0.707106769 : f32
    %128 = vector.broadcast %cst_52 : f32 to vector<8x64xf32>
    %129 = arith.mulf %125, %128 : vector<8x64xf32>
    %130 = math.erf %129 : vector<8x64xf32>
    %cst_53 = arith.constant 1.000000e+00 : f32
    %131 = vector.broadcast %cst_53 : f32 to vector<8x64xf32>
    %132 = arith.addf %131, %130 : vector<8x64xf32>
    %133 = arith.mulf %127, %132 : vector<8x64xf32>
    %134 = arith.truncf %133 : vector<8x64xf32> to vector<8x64xbf16>
    %c0_54 = arith.constant 0 : index
    %c0_55 = arith.constant 0 : index
    %c0_56 = arith.constant 0 : index
    %135 = vector.load %arg11[%c0_54, %c0_55, %c0_56] : memref<1x64x32xbf16, #tpu.memory_space<vmem>>, vector<1x64x32xbf16>
    %136 = vector.shape_cast %135 : vector<1x64x32xbf16> to vector<64x32xbf16>
    %cst_57 = arith.constant dense<0.000000e+00> : vector<8x32xf32>
    %137 = tpu.matmul %134, %136, %cst_57 {dimension_numbers = #tpu.dot_dimension_numbers<[1], [0], [0], [1], [0, 0, 1, 1], [], []>} : vector<8x64xbf16>, vector<64x32xbf16>, vector<8x32xf32> -> vector<8x32xf32>
    %138 = vector.broadcast %14 : vector<1x32xf32> to vector<8x32xf32>
    %139 = arith.addf %137, %138 : vector<8x32xf32>
    %140 = vector.broadcast %15 : vector<1x32xf32> to vector<8x32xf32>
    %141 = arith.mulf %139, %140 : vector<8x32xf32>
    %142 = arith.addf %141, %95 : vector<8x32xf32>
    %143 = arith.index_cast %arg1 : i32 to index
    %c0_58 = arith.constant 0 : index
    %c0_59 = arith.constant 0 : index
    %144 = vector.load %arg12[%143, %c0_58, %c0_59] : memref<2x8x32xf32, #tpu.memory_space<vmem>>, vector<1x8x32xf32>
    %145 = vector.shape_cast %144 : vector<1x8x32xf32> to vector<8x32xf32>
    %146 = vector.shape_cast %142 : vector<8x32xf32> to vector<1x8x32xf32>
    tpu.vector_store %arg12[%143, %c0_58, %c0_59], %146 {strides = array<i32>} : memref<2x8x32xf32, #tpu.memory_space<vmem>>, vector<1x8x32xf32>,
    return
  }
  func.func @transform_0(%arg0: i32, %arg1: i32) -> (i32, i32, i32) {
    %c0_i32 = arith.constant 0 : i32
    %c0_i32_0 = arith.constant 0 : i32
    %c0_i32_1 = arith.constant 0 : i32
    %c0_i32_2 = arith.constant 0 : i32
    return %c0_i32, %c0_i32_0, %c0_i32_1 : i32, i32, i32
  }
  func.func @transform_1(%arg0: i32, %arg1: i32) -> (i32, i32, i32) {
    %c0_i32 = arith.constant 0 : i32
    %c0_i32_0 = arith.constant 0 : i32
    %c0_i32_1 = arith.constant 0 : i32
    return %arg0, %c0_i32, %c0_i32_0 : i32, i32, i32
  }
  func.func @transform_2(%arg0: i32, %arg1: i32) -> (i32, i32, i32, i32) {
    %c0_i32 = arith.constant 0 : i32
    %c0_i32_0 = arith.constant 0 : i32
    %c0_i32_1 = arith.constant 0 : i32
    %c0_i32_2 = arith.constant 0 : i32
    return %arg0, %c0_i32, %c0_i32_0, %c0_i32_1 : i32, i32, i32, i32
  }
  func.func @transform_3(%arg0: i32, %arg1: i32) -> (i32, i32, i32) {
    %c0_i32 = arith.constant 0 : i32
    %c0_i32_0 = arith.constant 0 : i32
    %c0_i32_1 = arith.constant 0 : i32
    return %arg0, %c0_i32, %c0_i32_0 : i32, i32, i32
  }
  func.func @transform_4(%arg0: i32, %arg1: i32) -> (i32, i32, i32, i32) {
    %c0_i32 = arith.constant 0 : i32
    %c0_i32_0 = arith.constant 0 : i32
    %c0_i32_1 = arith.constant 0 : i32
    %c0_i32_2 = arith.constant 0 : i32
    return %arg0, %c0_i32, %c0_i32_0, %c0_i32_1 : i32, i32, i32, i32
  }
  func.func @transform_5(%arg0: i32, %arg1: i32) -> (i32, i32, i32, i32) {
    %c0_i32 = arith.constant 0 : i32
    %c0_i32_0 = arith.constant 0 : i32
    %c0_i32_1 = arith.constant 0 : i32
    %c0_i32_2 = arith.constant 0 : i32
    return %arg0, %c0_i32, %c0_i32_0, %c0_i32_1 : i32, i32, i32, i32
  }
  func.func @transform_6(%arg0: i32, %arg1: i32) -> (i32, i32, i32, i32) {
    %c0_i32 = arith.constant 0 : i32
    %c0_i32_0 = arith.constant 0 : i32
    %c0_i32_1 = arith.constant 0 : i32
    %c0_i32_2 = arith.constant 0 : i32
    return %arg0, %c0_i32, %c0_i32_0, %c0_i32_1 : i32, i32, i32, i32
  }
  func.func @transform_7(%arg0: i32, %arg1: i32) -> (i32, i32, i32, i32) {
    %c0_i32 = arith.constant 0 : i32
    %c0_i32_0 = arith.constant 0 : i32
    %c0_i32_1 = arith.constant 0 : i32
    %c0_i32_2 = arith.constant 0 : i32
    return %arg0, %c0_i32, %c0_i32_0, %c0_i32_1 : i32, i32, i32, i32
  }
  func.func @transform_8(%arg0: i32, %arg1: i32) -> (i32, i32, i32) {
    %c0_i32 = arith.constant 0 : i32
    %c0_i32_0 = arith.constant 0 : i32
    %c0_i32_1 = arith.constant 0 : i32
    return %arg0, %c0_i32, %c0_i32_0 : i32, i32, i32
  }
  func.func @transform_9(%arg0: i32, %arg1: i32) -> (i32, i32, i32) {
    %c0_i32 = arith.constant 0 : i32
    %c0_i32_0 = arith.constant 0 : i32
    %c0_i32_1 = arith.constant 0 : i32
    return %arg0, %c0_i32, %c0_i32_0 : i32, i32, i32
  }
  func.func @transform_10(%arg0: i32, %arg1: i32) -> (i32, i32, i32) {
    %c0_i32 = arith.constant 0 : i32
    %c0_i32_0 = arith.constant 0 : i32
    %c0_i32_1 = arith.constant 0 : i32
    %c0_i32_2 = arith.constant 0 : i32
    return %c0_i32, %c0_i32_0, %c0_i32_1 : i32, i32, i32
  }
}

</mosaic_0001>

<llo_original>
// kernel: encoder_forward.1
$region0: #{encoder_forward.1}
  #allocation0 [shape = 'u32[]', space=smem, size = 0x4, offset = 0x4, fixed_abs, tag = 'smem constant byte address 0x4 - core index']
  #allocation1 [shape = 'u32[144,128]{1,0:T(1,128)}', space=vmem, size = 0x12000, scoped, tag = 'internal scratch']
  %s0 = inlined_call_operand.hbm [shape: f32[2,8,32], index: 0, kind: input, shape index: {}, may-alias: {0,10}]
  %s1 = inlined_call_operand.vmem [shape: f32[2,8,32], index: 1, kind: input, shape index: {}]
  %s2 = inlined_call_operand.vmem [shape: f32[2,3,4,8], index: 2, kind: input, shape index: {}]
  %s3 = inlined_call_operand.vmem [shape: f32[2,1,64], index: 3, kind: input, shape index: {}]
  %s4 = inlined_call_operand.vmem [shape: bf16[2,4,32,8], index: 4, kind: input, shape index: {}]
  %s5 = inlined_call_operand.vmem [shape: bf16[2,4,32,8], index: 5, kind: input, shape index: {}]
  %s6 = inlined_call_operand.vmem [shape: bf16[2,4,32,8], index: 6, kind: input, shape index: {}]
  %s7 = inlined_call_operand.vmem [shape: bf16[2,4,8,32], index: 7, kind: input, shape index: {}]
  %s8 = inlined_call_operand.vmem [shape: bf16[2,32,64], index: 8, kind: input, shape index: {}]
  %s9 = inlined_call_operand.vmem [shape: bf16[2,64,32], index: 9, kind: input, shape index: {}]
  %s10 = inlined_call_operand.hbm [shape: f32[2,8,32], index: 10, kind: output, shape index: {}, may-alias: {0,10}]
  %s11 = sld [smem:[#allocation0]]
  $region81: #{encoder_forward.1} parent=0
    _
  %s13 = ssub.s32 1, %s11
  %s14 = scalar_select 0, %s13, %s11
  $region1: #{encoder_forward.1} parent=0
    #allocation2 [shape = 'u8[8192]{0}', space=vmem, size = 0x2000, scoped, tag = 'input window, operand 0, single buffered']
    #allocation3 [shape = 's32[2]{0}', space=sflag, size = 0x8, scoped, tag = 'scoped memory for encoder_forward.1']
    #allocation4 [shape = 's32[2]{0}', space=sflag, size = 0x8, scoped, tag = 'scoped memory for encoder_forward.1']
    #allocation5 [shape = 'u8[8192]{0}', space=vmem, size = 0x2000, scoped, tag = 'output window, operand 0, single buffered']
    %15 = vsyncpa [#allocation3], 0
    %16 = vsyncpa [#allocation4], 0
    loop: start=0, step=1, limit=6
    $region2: #{encoder_forward.1} parent=1 // loop_pre_header
      _
    $region3: #{encoder_forward.1} parent=1 // loop_header
      %s18 = sphi 0, %s22
      %p19 = scmp.ge.s32.totalorder %s18, 6
      %s25 = sphi 0, %s37
      %s26 = sphi 0, %s33
      %s27 = sphi 0, %s25
      %s28 = sphi 0, %s26
      %s29 = sphi 0, %s27
      %s30 = sphi 0, %s28
      %s38 = sphi 0, %s38
      %s40 = sphi 0, %s38
      %s41 = sphi 0, %s40
      %s55 = sphi 0, %s41
      %s61 = sphi 0, %s63
      %s64 = sphi 0, %s61
      %s65 = sphi 0, %s64
      %s81 = sphi 0, %s65
      %s87 = sphi 0, %s89
      %s90 = sphi 0, %s87
      %s91 = sphi 0, %s90
      %s107 = sphi 0, %s91
      %s113 = sphi 0, %s115
      %s116 = sphi 0, %s113
      %s117 = sphi 0, %s116
      %s133 = sphi 0, %s117
      %s139 = sphi 0, %s141
      %s142 = sphi 0, %s139
      %s143 = sphi 0, %s142
      %s159 = sphi 0, %s143
      %s165 = sphi 0, %s167
      %s168 = sphi 0, %s165
      %s169 = sphi 0, %s168
      %s185 = sphi 0, %s169
      %s191 = sphi 0, %s193
      %s194 = sphi 0, %s191
      %s195 = sphi 0, %s194
      %s211 = sphi 0, %s195
      %s217 = sphi 0, %s219
      %s220 = sphi 0, %s217
      %s221 = sphi 0, %s220
      %s237 = sphi 0, %s221
      %s243 = sphi 0, %s245
      %s246 = sphi 0, %s243
      %s247 = sphi 0, %s246
      %s263 = sphi 0, %s247
      %s269 = sphi 0, %s271
      %s272 = sphi 0, %s269
      %s273 = sphi 0, %s272
      %s289 = sphi 0, %s273
      %s293 = sphi 0, %s293
      %s295 = sphi 0, %s293
      %s296 = sphi 0, %s295
      %s310 = sphi 0, %s296
    $region4: #{encoder_forward.1} parent=1 // loop_header_branch
      %21 = sbr.rel (%p19) target = $region8
    $region5: #{encoder_forward.1} parent=1 // loop_body
      %s23 = ssub.s32 %s18, 1
      %s24 = ssub.s32 %s18, 2
      %s31 = sadd.s32 1, %s26
      %p32 = scmp.ge.s32.totalorder %s31, 2
      %s33 = scalar_select %p32, 0, %s31
      %s34 = sadd.s32 1, %s25
      %s35 = scalar_select %p32, %s34, %s25
      %p36 = scmp.ge.s32.totalorder %s35, 2
      %s37 = scalar_select %p36, 0, %s35
      %s39 = sadd.s32 %s38, 1
      %p42 = scmp.eq.s32.totalorder %s18, 3
      %p43 = scmp.ne.s32.totalorder %s38, %s40
      %p44 = scmp.eq.s32.totalorder %s18, 0
      %p45 = por %p43, %p44
      %p46 = scmp.ne.s32.totalorder %s38, %s40
      %p47 = scmp.eq.s32.totalorder %s23, 3
      %p48 = por %p46, %p47
      %p49 = scmp.ne.s32.totalorder %s40, %s41
      %p50 = scmp.eq.s32.totalorder %s23, 0
      %p51 = por %p49, %p50
      %p52 = scmp.ne.s32.totalorder %s40, %s41
      %p53 = scmp.eq.s32.totalorder %s24, 3
      %p54 = por %p52, %p53
      %p56 = scmp.ne.s32.totalorder %s41, %s55
      %p57 = scmp.eq.s32.totalorder %s24, 0
      %p58 = por %p56, %p57
      %s59 = ssub.s32 %s25, %s37
      %p60 = scmp.eq.s32.totalorder %s59, 0
      %s62 = sadd.s32 %s61, 1
      %s63 = scalar_select %p60, %s61, %s62
      %p66 = pneg %p60
      %p67 = scmp.eq.s32.totalorder %s18, 3
      %p68 = por %p66, %p67
      %p69 = scmp.ne.s32.totalorder %s61, %s64
      %p70 = scmp.eq.s32.totalorder %s18, 0
      %p71 = por %p69, %p70
      %p72 = scmp.ne.s32.totalorder %s61, %s64
      %p73 = scmp.eq.s32.totalorder %s23, 3
      %p74 = por %p72, %p73
      %p75 = scmp.ne.s32.totalorder %s64, %s65
      %p76 = scmp.eq.s32.totalorder %s23, 0
      %p77 = por %p75, %p76
      %p78 = scmp.ne.s32.totalorder %s64, %s65
      %p79 = scmp.eq.s32.totalorder %s24, 3
      %p80 = por %p78, %p79
      %p82 = scmp.ne.s32.totalorder %s65, %s81
      %p83 = scmp.eq.s32.totalorder %s24, 0
      %p84 = por %p82, %p83
      %s85 = ssub.s32 %s25, %s37
      %p86 = scmp.eq.s32.totalorder %s85, 0
      %s88 = sadd.s32 %s87, 1
      %s89 = scalar_select %p86, %s87, %s88
      %p92 = pneg %p86
      %p93 = scmp.eq.s32.totalorder %s18, 3
      %p94 = por %p92, %p93
      %p95 = scmp.ne.s32.totalorder %s87, %s90
      %p96 = scmp.eq.s32.totalorder %s18, 0
      %p97 = por %p95, %p96
      %p98 = scmp.ne.s32.totalorder %s87, %s90
      %p99 = scmp.eq.s32.totalorder %s23, 3
      %p100 = por %p98, %p99
      %p101 = scmp.ne.s32.totalorder %s90, %s91
      %p102 = scmp.eq.s32.totalorder %s23, 0
      %p103 = por %p101, %p102
      %p104 = scmp.ne.s32.totalorder %s90, %s91
      %p105 = scmp.eq.s32.totalorder %s24, 3
      %p106 = por %p104, %p105
      %p108 = scmp.ne.s32.totalorder %s91, %s107
      %p109 = scmp.eq.s32.totalorder %s24, 0
      %p110 = por %p108, %p109
      %s111 = ssub.s32 %s25, %s37
      %p112 = scmp.eq.s32.totalorder %s111, 0
      %s114 = sadd.s32 %s113, 1
      %s115 = scalar_select %p112, %s113, %s114
      %p118 = pneg %p112
      %p119 = scmp.eq.s32.totalorder %s18, 3
      %p120 = por %p118, %p119
      %p121 = scmp.ne.s32.totalorder %s113, %s116
      %p122 = scmp.eq.s32.totalorder %s18, 0
      %p123 = por %p121, %p122
      %p124 = scmp.ne.s32.totalorder %s113, %s116
      %p125 = scmp.eq.s32.totalorder %s23, 3
      %p126 = por %p124, %p125
      %p127 = scmp.ne.s32.totalorder %s116, %s117
      %p128 = scmp.eq.s32.totalorder %s23, 0
      %p129 = por %p127, %p128
      %p130 = scmp.ne.s32.totalorder %s116, %s117
      %p131 = scmp.eq.s32.totalorder %s24, 3
      %p132 = por %p130, %p131
      %p134 = scmp.ne.s32.totalorder %s117, %s133
      %p135 = scmp.eq.s32.totalorder %s24, 0
      %p136 = por %p134, %p135
      %s137 = ssub.s32 %s25, %s37
      %p138 = scmp.eq.s32.totalorder %s137, 0
      %s140 = sadd.s32 %s139, 1
      %s141 = scalar_select %p138, %s139, %s140
      %p144 = pneg %p138
      %p145 = scmp.eq.s32.totalorder %s18, 3
      %p146 = por %p144, %p145
      %p147 = scmp.ne.s32.totalorder %s139, %s142
      %p148 = scmp.eq.s32.totalorder %s18, 0
      %p149 = por %p147, %p148
      %p150 = scmp.ne.s32.totalorder %s139, %s142
      %p151 = scmp.eq.s32.totalorder %s23, 3
      %p152 = por %p150, %p151
      %p153 = scmp.ne.s32.totalorder %s142, %s143
      %p154 = scmp.eq.s32.totalorder %s23, 0
      %p155 = por %p153, %p154
      %p156 = scmp.ne.s32.totalorder %s142, %s143
      %p157 = scmp.eq.s32.totalorder %s24, 3
      %p158 = por %p156, %p157
      %p160 = scmp.ne.s32.totalorder %s143, %s159
      %p161 = scmp.eq.s32.totalorder %s24, 0
      %p162 = por %p160, %p161
      %s163 = ssub.s32 %s25, %s37
      %p164 = scmp.eq.s32.totalorder %s163, 0
      %s166 = sadd.s32 %s165, 1
      %s167 = scalar_select %p164, %s165, %s166
      %p170 = pneg %p164
      %p171 = scmp.eq.s32.totalorder %s18, 3
      %p172 = por %p170, %p171
      %p173 = scmp.ne.s32.totalorder %s165, %s168
      %p174 = scmp.eq.s32.totalorder %s18, 0
      %p175 = por %p173, %p174
      %p176 = scmp.ne.s32.totalorder %s165, %s168
      %p177 = scmp.eq.s32.totalorder %s23, 3
      %p178 = por %p176, %p177
      %p179 = scmp.ne.s32.totalorder %s168, %s169
      %p180 = scmp.eq.s32.totalorder %s23, 0
      %p181 = por %p179, %p180
      %p182 = scmp.ne.s32.totalorder %s168, %s169
      %p183 = scmp.eq.s32.totalorder %s24, 3
      %p184 = por %p182, %p183
      %p186 = scmp.ne.s32.totalorder %s169, %s185
      %p187 = scmp.eq.s32.totalorder %s24, 0
      %p188 = por %p186, %p187
      %s189 = ssub.s32 %s25, %s37
      %p190 = scmp.eq.s32.totalorder %s189, 0
      %s192 = sadd.s32 %s191, 1
      %s193 = scalar_select %p190, %s191, %s192
      %p196 = pneg %p190
      %p197 = scmp.eq.s32.totalorder %s18, 3
      %p198 = por %p196, %p197
      %p199 = scmp.ne.s32.totalorder %s191, %s194
      %p200 = scmp.eq.s32.totalorder %s18, 0
      %p201 = por %p199, %p200
      %p202 = scmp.ne.s32.totalorder %s191, %s194
      %p203 = scmp.eq.s32.totalorder %s23, 3
      %p204 = por %p202, %p203
      %p205 = scmp.ne.s32.totalorder %s194, %s195
      %p206 = scmp.eq.s32.totalorder %s23, 0
      %p207 = por %p205, %p206
      %p208 = scmp.ne.s32.totalorder %s194, %s195
      %p209 = scmp.eq.s32.totalorder %s24, 3
      %p210 = por %p208, %p209
      %p212 = scmp.ne.s32.totalorder %s195, %s211
      %p213 = scmp.eq.s32.totalorder %s24, 0
      %p214 = por %p212, %p213
      %s215 = ssub.s32 %s25, %s37
      %p216 = scmp.eq.s32.totalorder %s215, 0
      %s218 = sadd.s32 %s217, 1
      %s219 = scalar_select %p216, %s217, %s218
      %p222 = pneg %p216
      %p223 = scmp.eq.s32.totalorder %s18, 3
      %p224 = por %p222, %p223
      %p225 = scmp.ne.s32.totalorder %s217, %s220
      %p226 = scmp.eq.s32.totalorder %s18, 0
      %p227 = por %p225, %p226
      %p228 = scmp.ne.s32.totalorder %s217, %s220
      %p229 = scmp.eq.s32.totalorder %s23, 3
      %p230 = por %p228, %p229
      %p231 = scmp.ne.s32.totalorder %s220, %s221
      %p232 = scmp.eq.s32.totalorder %s23, 0
      %p233 = por %p231, %p232
      %p234 = scmp.ne.s32.totalorder %s220, %s221
      %p235 = scmp.eq.s32.totalorder %s24, 3
      %p236 = por %p234, %p235
      %p238 = scmp.ne.s32.totalorder %s221, %s237
      %p239 = scmp.eq.s32.totalorder %s24, 0
      %p240 = por %p238, %p239
      %s241 = ssub.s32 %s25, %s37
      %p242 = scmp.eq.s32.totalorder %s241, 0
      %s244 = sadd.s32 %s243, 1
      %s245 = scalar_select %p242, %s243, %s244
      %p248 = pneg %p242
      %p249 = scmp.eq.s32.totalorder %s18, 3
      %p250 = por %p248, %p249
      %p251 = scmp.ne.s32.totalorder %s243, %s246
      %p252 = scmp.eq.s32.totalorder %s18, 0
      %p253 = por %p251, %p252
      %p254 = scmp.ne.s32.totalorder %s243, %s246
      %p255 = scmp.eq.s32.totalorder %s23, 3
      %p256 = por %p254, %p255
      %p257 = scmp.ne.s32.totalorder %s246, %s247
      %p258 = scmp.eq.s32.totalorder %s23, 0
      %p259 = por %p257, %p258
      %p260 = scmp.ne.s32.totalorder %s246, %s247
      %p261 = scmp.eq.s32.totalorder %s24, 3
      %p262 = por %p260, %p261
      %p264 = scmp.ne.s32.totalorder %s247, %s263
      %p265 = scmp.eq.s32.totalorder %s24, 0
      %p266 = por %p264, %p265
      %s267 = ssub.s32 %s25, %s37
      %p268 = scmp.eq.s32.totalorder %s267, 0
      %s270 = sadd.s32 %s269, 1
      %s271 = scalar_select %p268, %s269, %s270
      %p274 = pneg %p268
      %p275 = scmp.eq.s32.totalorder %s18, 3
      %p276 = por %p274, %p275
      %p277 = scmp.ne.s32.totalorder %s269, %s272
      %p278 = scmp.eq.s32.totalorder %s18, 0
      %p279 = por %p277, %p278
      %p280 = scmp.ne.s32.totalorder %s269, %s272
      %p281 = scmp.eq.s32.totalorder %s23, 3
      %p282 = por %p280, %p281
      %p283 = scmp.ne.s32.totalorder %s272, %s273
      %p284 = scmp.eq.s32.totalorder %s23, 0
      %p285 = por %p283, %p284
      %p286 = scmp.ne.s32.totalorder %s272, %s273
      %p287 = scmp.eq.s32.totalorder %s24, 3
      %p288 = por %p286, %p287
      %p290 = scmp.ne.s32.totalorder %s273, %s289
      %p291 = scmp.eq.s32.totalorder %s24, 0
      %p292 = por %p290, %p291
      %s294 = sadd.s32 %s293, 1
      %p297 = scmp.eq.s32.totalorder %s18, 3
      %p298 = scmp.ne.s32.totalorder %s293, %s295
      %p299 = scmp.eq.s32.totalorder %s18, 0
      %p300 = por %p298, %p299
      %p301 = scmp.ne.s32.totalorder %s293, %s295
      %p302 = scmp.eq.s32.totalorder %s23, 3
      %p303 = por %p301, %p302
      %p304 = scmp.ne.s32.totalorder %s295, %s296
      %p305 = scmp.eq.s32.totalorder %s23, 0
      %p306 = por %p304, %p305
      %p307 = scmp.ne.s32.totalorder %s295, %s296
      %p308 = scmp.eq.s32.totalorder %s24, 3
      %p309 = por %p307, %p308
      %p311 = scmp.ne.s32.totalorder %s296, %s310
      %p312 = scmp.eq.s32.totalorder %s24, 0
      %p313 = por %p311, %p312
      %p314 = scmp.le.s32.totalorder 1, %s18
      %p315 = scmp.lt.s32.totalorder %s18, 5
      %p316 = pnand %p314, %p315
      %p317 = pneg %p316
      // Predicated region
      $region9: #{encoder_forward.1} parent=5 // pred_check
        _
      $region10: #{encoder_forward.1} parent=5 // pred_check_branch
        %319 = sbr.rel (%p316) target = $region12
      $region11: #{encoder_forward.1} parent=5 // pred_region
        %s320 = ssub.s32 %s18, 1
        // Predicated region
        $region13: #{encoder_forward.1} parent=11 // pred_check
          %p321 = pneg %p51
        $region14: #{encoder_forward.1} parent=11 // pred_check_branch
          %323 = sbr.rel (%p321) target = $region16
        $region15: #{encoder_forward.1} parent=11 // pred_region
          %s325 = ssub.s32 256, 256
          %326 = vsyncadd [#allocation3], %s325
          %s327 = sshll.u32 [#allocation2], 4
          %s328 = int_to_ptr.vmem [resolvable:$true] %s327
          %333 = dma.hbm_to_vmem [thread:$0]  %s0, 256, %s328, [#allocation3], 128, 128, 8
        $region16: #{encoder_forward.1} parent=11 // pred_fallthru
          _
      $region12: #{encoder_forward.1} parent=5 // pred_fallthru
        _
      %p334 = scmp.lt.s32.totalorder %s18, 4
      // Predicated region
      $region17: #{encoder_forward.1} parent=5 // pred_check
        %p335 = pneg %p334
      $region18: #{encoder_forward.1} parent=5 // pred_check_branch
        %337 = sbr.rel (%p335) target = $region20
      $region19: #{encoder_forward.1} parent=5 // pred_region
        // Predicated region
        $region21: #{encoder_forward.1} parent=19 // pred_check
          %p338 = pneg %p71
        $region22: #{encoder_forward.1} parent=19 // pred_check_branch
          %340 = sbr.rel (%p338) target = $region24
        $region23: #{encoder_forward.1} parent=19 // pred_region
          %p341 = scmp.lt.s32.totalorder %s25, 1
          %s342 = scalar_select %p341, %s25, 1
          %s343 = smul.addr %s342, 8
          %s344 = scalar_lea.vmem %s1, %s343
        $region24: #{encoder_forward.1} parent=19 // pred_fallthru
          _
        // Predicated region
        $region25: #{encoder_forward.1} parent=19 // pred_check
          %p345 = pneg %p97
        $region26: #{encoder_forward.1} parent=19 // pred_check_branch
          %347 = sbr.rel (%p345) target = $region28
        $region27: #{encoder_forward.1} parent=19 // pred_region
          %p348 = scmp.lt.s32.totalorder %s25, 1
          %s349 = scalar_select %p348, %s25, 1
          %s350 = smul.addr %s349, 3
          %s351 = smul.addr %s350, 4
          %s352 = scalar_lea.vmem %s2, %s351
        $region28: #{encoder_forward.1} parent=19 // pred_fallthru
          _
        // Predicated region
        $region29: #{encoder_forward.1} parent=19 // pred_check
          %p353 = pneg %p123
        $region30: #{encoder_forward.1} parent=19 // pred_check_branch
          %355 = sbr.rel (%p353) target = $region32
        $region31: #{encoder_forward.1} parent=19 // pred_region
          %p356 = scmp.lt.s32.totalorder %s25, 1
          %s357 = scalar_select %p356, %s25, 1
          %s358 = scalar_lea.vmem %s3, %s357
        $region32: #{encoder_forward.1} parent=19 // pred_fallthru
          _
        // Predicated region
        $region33: #{encoder_forward.1} parent=19 // pred_check
          %p359 = pneg %p149
        $region34: #{encoder_forward.1} parent=19 // pred_check_branch
          %361 = sbr.rel (%p359) target = $region36
        $region35: #{encoder_forward.1} parent=19 // pred_region
          %p362 = scmp.lt.s32.totalorder %s25, 1
          %s363 = scalar_select %p362, %s25, 1
          %s364 = smul.addr %s363, 16
          %s365 = smul.addr %s364, 4
          %s366 = scalar_lea.vmem %s4, %s365
        $region36: #{encoder_forward.1} parent=19 // pred_fallthru
          _
        // Predicated region
        $region37: #{encoder_forward.1} parent=19 // pred_check
          %p367 = pneg %p175
        $region38: #{encoder_forward.1} parent=19 // pred_check_branch
          %369 = sbr.rel (%p367) target = $region40
        $region39: #{encoder_forward.1} parent=19 // pred_region
          %p370 = scmp.lt.s32.totalorder %s25, 1
          %s371 = scalar_select %p370, %s25, 1
          %s372 = smul.addr %s371, 16
          %s373 = smul.addr %s372, 4
          %s374 = scalar_lea.vmem %s5, %s373
        $region40: #{encoder_forward.1} parent=19 // pred_fallthru
          _
        // Predicated region
        $region41: #{encoder_forward.1} parent=19 // pred_check
          %p375 = pneg %p201
        $region42: #{encoder_forward.1} parent=19 // pred_check_branch
          %377 = sbr.rel (%p375) target = $region44
        $region43: #{encoder_forward.1} parent=19 // pred_region
          %p378 = scmp.lt.s32.totalorder %s25, 1
          %s379 = scalar_select %p378, %s25, 1
          %s380 = smul.addr %s379, 16
          %s381 = smul.addr %s380, 4
          %s382 = scalar_lea.vmem %s6, %s381
        $region44: #{encoder_forward.1} parent=19 // pred_fallthru
          _
        // Predicated region
        $region45: #{encoder_forward.1} parent=19 // pred_check
          %p383 = pneg %p227
        $region46: #{encoder_forward.1} parent=19 // pred_check_branch
          %385 = sbr.rel (%p383) target = $region48
        $region47: #{encoder_forward.1} parent=19 // pred_region
          %p386 = scmp.lt.s32.totalorder %s25, 1
          %s387 = scalar_select %p386, %s25, 1
          %s388 = smul.addr %s387, 4
          %s389 = smul.addr %s388, 4
          %s390 = scalar_lea.vmem %s7, %s389
        $region48: #{encoder_forward.1} parent=19 // pred_fallthru
          _
        // Predicated region
        $region49: #{encoder_forward.1} parent=19 // pred_check
          %p391 = pneg %p253
        $region50: #{encoder_forward.1} parent=19 // pred_check_branch
          %393 = sbr.rel (%p391) target = $region52
        $region51: #{encoder_forward.1} parent=19 // pred_region
          %p394 = scmp.lt.s32.totalorder %s25, 1
          %s395 = scalar_select %p394, %s25, 1
          %s396 = smul.addr %s395, 4
          %s397 = smul.addr %s396, 4
          %s398 = scalar_lea.vmem %s8, %s397
        $region52: #{encoder_forward.1} parent=19 // pred_fallthru
          _
        // Predicated region
        $region53: #{encoder_forward.1} parent=19 // pred_check
          %p399 = pneg %p279
        $region54: #{encoder_forward.1} parent=19 // pred_check_branch
          %401 = sbr.rel (%p399) target = $region56
        $region55: #{encoder_forward.1} parent=19 // pred_region
          %p402 = scmp.lt.s32.totalorder %s25, 1
          %s403 = scalar_select %p402, %s25, 1
          %s404 = smul.addr %s403, 8
          %s405 = smul.addr %s404, 4
          %s406 = scalar_lea.vmem %s9, %s405
        $region56: #{encoder_forward.1} parent=19 // pred_fallthru
          _
      $region20: #{encoder_forward.1} parent=5 // pred_fallthru
        _
      %p407 = scmp.le.s32.totalorder 1, %s18
      %p408 = scmp.lt.s32.totalorder %s18, 5
      %p409 = pnand %p407, %p408
      %p410 = pneg %p409
      // Predicated region
      $region57: #{encoder_forward.1} parent=5 // pred_check
        _
      $region58: #{encoder_forward.1} parent=5 // pred_check_branch
        %412 = sbr.rel (%p409) target = $region60
      $region59: #{encoder_forward.1} parent=5 // pred_region
        %s413 = ssub.s32 %s18, 1
        // Predicated region
        $region61: #{encoder_forward.1} parent=59 // pred_check
          %p414 = pneg %p51
        $region62: #{encoder_forward.1} parent=59 // pred_check_branch
          %416 = sbr.rel (%p414) target = $region64
        $region63: #{encoder_forward.1} parent=59 // pred_region
          %417 = dma.done [#allocation3], 256
        $region64: #{encoder_forward.1} parent=59 // pred_fallthru
          _
        %p418 = pneg %p51
        %p419 = pneg %p48
        %p420 = scmp.lt.s32.totalorder %s27, 1
        %s421 = scalar_select %p420, %s27, 1
        %s422 = smul.addr %s421, 8
        %s423 = scalar_lea.vmem %s1, %s422
        %p424 = pneg %p77
        %p425 = pneg %p74
        %p426 = scmp.lt.s32.totalorder %s27, 1
        %s427 = scalar_select %p426, %s27, 1
        %s428 = smul.addr %s427, 3
        %s429 = smul.addr %s428, 4
        %s430 = scalar_lea.vmem %s2, %s429
        %p431 = pneg %p103
        %p432 = pneg %p100
        %p433 = scmp.lt.s32.totalorder %s27, 1
        %s434 = scalar_select %p433, %s27, 1
        %s435 = scalar_lea.vmem %s3, %s434
        %p436 = pneg %p129
        %p437 = pneg %p126
        %p438 = scmp.lt.s32.totalorder %s27, 1
        %s439 = scalar_select %p438, %s27, 1
        %s440 = smul.addr %s439, 16
        %s441 = smul.addr %s440, 4
        %s442 = scalar_lea.vmem %s4, %s441
        %p443 = pneg %p155
        %p444 = pneg %p152
        %p445 = scmp.lt.s32.totalorder %s27, 1
        %s446 = scalar_select %p445, %s27, 1
        %s447 = smul.addr %s446, 16
        %s448 = smul.addr %s447, 4
        %s449 = scalar_lea.vmem %s5, %s448
        %p450 = pneg %p181
        %p451 = pneg %p178
        %p452 = scmp.lt.s32.totalorder %s27, 1
        %s453 = scalar_select %p452, %s27, 1
        %s454 = smul.addr %s453, 16
        %s455 = smul.addr %s454, 4
        %s456 = scalar_lea.vmem %s6, %s455
        %p457 = pneg %p207
        %p458 = pneg %p204
        %p459 = scmp.lt.s32.totalorder %s27, 1
        %s460 = scalar_select %p459, %s27, 1
        %s461 = smul.addr %s460, 4
        %s462 = smul.addr %s461, 4
        %s463 = scalar_lea.vmem %s7, %s462
        %p464 = pneg %p233
        %p465 = pneg %p230
        %p466 = scmp.lt.s32.totalorder %s27, 1
        %s467 = scalar_select %p466, %s27, 1
        %s468 = smul.addr %s467, 4
        %s469 = smul.addr %s468, 4
        %s470 = scalar_lea.vmem %s8, %s469
        %p471 = pneg %p259
        %p472 = pneg %p256
        %p473 = scmp.lt.s32.totalorder %s27, 1
        %s474 = scalar_select %p473, %s27, 1
        %s475 = smul.addr %s474, 8
        %s476 = smul.addr %s475, 4
        %s477 = scalar_lea.vmem %s9, %s476
        %p478 = pneg %p285
        %p479 = pneg %p282
        %p480 = pneg %p306
        %p481 = pneg %p303
        %p482 = scmp.lt.s32.totalorder %s27, 1
        %s483 = scalar_select %p482, %s27, 1
        %s484 = smul.addr %s483, 8
        %s485 = scalar_lea.vmem %s1, %s484
        %p486 = scmp.lt.s32.totalorder %s27, 1
        %s487 = scalar_select %p486, %s27, 1
        %s488 = smul.addr %s487, 3
        %s489 = smul.addr %s488, 4
        %s490 = scalar_lea.vmem %s2, %s489
        %p491 = scmp.lt.s32.totalorder %s27, 1
        %s492 = scalar_select %p491, %s27, 1
        %s493 = scalar_lea.vmem %s3, %s492
        %p494 = scmp.lt.s32.totalorder %s27, 1
        %s495 = scalar_select %p494, %s27, 1
        %s496 = smul.addr %s495, 16
        %s497 = smul.addr %s496, 4
        %s498 = scalar_lea.vmem %s4, %s497
        %p499 = scmp.lt.s32.totalorder %s27, 1
        %s500 = scalar_select %p499, %s27, 1
        %s501 = smul.addr %s500, 16
        %s502 = smul.addr %s501, 4
        %s503 = scalar_lea.vmem %s5, %s502
        %p504 = scmp.lt.s32.totalorder %s27, 1
        %s505 = scalar_select %p504, %s27, 1
        %s506 = smul.addr %s505, 16
        %s507 = smul.addr %s506, 4
        %s508 = scalar_lea.vmem %s6, %s507
        %p509 = scmp.lt.s32.totalorder %s27, 1
        %s510 = scalar_select %p509, %s27, 1
        %s511 = smul.addr %s510, 4
        %s512 = smul.addr %s511, 4
        %s513 = scalar_lea.vmem %s7, %s512
        %p514 = scmp.lt.s32.totalorder %s27, 1
        %s515 = scalar_select %p514, %s27, 1
        %s516 = smul.addr %s515, 4
        %s517 = smul.addr %s516, 4
        %s518 = scalar_lea.vmem %s8, %s517
        %p519 = scmp.lt.s32.totalorder %s27, 1
        %s520 = scalar_select %p519, %s27, 1
        %s521 = smul.addr %s520, 8
        %s522 = smul.addr %s521, 4
        %s523 = scalar_lea.vmem %s9, %s522
        %p525 = scmp.eq.s32.totalorder %s27, 0
        // Predicated region
        $region65: #{encoder_forward.1} parent=59 // pred_check
          %p526 = pneg %p525
        $region66: #{encoder_forward.1} parent=59 // pred_check_branch
          %528 = sbr.rel (%p526) target = $region68
        $region67: #{encoder_forward.1} parent=59 // pred_region
          %s529 = smul.u32 %s28, 8
          %s530 = scalar_lea.vmem [#allocation2], %s529
          %v531 = vld [vmem:[%s530] sm:$0xff]
          %s532 = scalar_lea.vmem [#allocation5], %s529
          %vm533 = vcmask 261120
          %534 = vst.msk [vmem:[%s532] sm:$0xff] %vm533, %v531
        $region68: #{encoder_forward.1} parent=59 // pred_fallthru
          _
        %s535 = smul.u32 %s28, 8
        %s536 = scalar_lea.vmem [#allocation5], %s535
        %v537 = vld [vmem:[%s536] sm:$0xff]
        %v538 = vld [vmem:[%s485] sm:$0xff]
        %v539 = vld [vmem:[%s490] sm:$0xf]
        %v540 = vld [vmem:[%s490 + $0x4] sm:$0xf]
        %v541 = vld [vmem:[%s490 + $0x8] sm:$0xf]
        %v544 = vunpack.c.l.s4 1966171168
        %v545 = vunpack.c.0.s8 %v544
        %v546 = vlaneseq
        %v547 = vshrl.u32 %v546, 7
        %v548 = vsub.s32 %v545, %v547
        %v549 = vrot.slane %v539, %v548
        %v550 = vcombine.high %v549, %v549
        %v552 = vunpack.c.l.s4 1966171168
        %v553 = vunpack.c.0.s8 %v552
        %v554 = vlaneseq
        %v555 = vshrl.u32 %v554, 7
        %v556 = vsub.s32 %v553, %v555
        %v557 = vrot.slane %v549, %v556
        %v559 = vunpack.c.l.s4 1966171168
        %v560 = vunpack.c.0.s8 %v559
        %v561 = vlaneseq
        %v562 = vshrl.u32 %v561, 7
        %v563 = vsub.s32 %v560, %v562
        %v564 = vrot.slane %v550, %v563
        %v565 = vcombine.high %v557, %v557
        %v566 = vcombine.high %v564, %v564
        %v569 = vunpack.c.l.s4 1966171168
        %v570 = vunpack.c.0.s8 %v569
        %v571 = vlaneseq
        %v572 = vshrl.u32 %v571, 7
        %v573 = vsub.s32 %v570, %v572
        %v574 = vrot.slane %v540, %v573
        %v575 = vcombine.high %v574, %v574
        %v577 = vunpack.c.l.s4 1966171168
        %v578 = vunpack.c.0.s8 %v577
        %v579 = vlaneseq
        %v580 = vshrl.u32 %v579, 7
        %v581 = vsub.s32 %v578, %v580
        %v582 = vrot.slane %v574, %v581
        %v584 = vunpack.c.l.s4 1966171168
        %v585 = vunpack.c.0.s8 %v584
        %v586 = vlaneseq
        %v587 = vshrl.u32 %v586, 7
        %v588 = vsub.s32 %v585, %v587
        %v589 = vrot.slane %v575, %v588
        %v590 = vcombine.high %v582, %v582
        %v591 = vcombine.high %v589, %v589
        %v594 = vunpack.c.l.s4 1966171168
        %v595 = vunpack.c.0.s8 %v594
        %v596 = vlaneseq
        %v597 = vshrl.u32 %v596, 7
        %v598 = vsub.s32 %v595, %v597
        %v599 = vrot.slane %v541, %v598
        %v600 = vcombine.high %v599, %v599
        %v602 = vunpack.c.l.s4 1966171168
        %v603 = vunpack.c.0.s8 %v602
        %v604 = vlaneseq
        %v605 = vshrl.u32 %v604, 7
        %v606 = vsub.s32 %v603, %v605
        %v607 = vrot.slane %v599, %v606
        %v609 = vunpack.c.l.s4 1966171168
        %v610 = vunpack.c.0.s8 %v609
        %v611 = vlaneseq
        %v612 = vshrl.u32 %v611, 7
        %v613 = vsub.s32 %v610, %v612
        %v614 = vrot.slane %v600, %v613
        %v615 = vcombine.high %v607, %v607
        %v616 = vcombine.high %v614, %v614
        %vm617 = vcmask 261120
        %v618 = vsel %vm617, %v537, 0.0
        %619 = vadd.xlane.f32.xlu0 %v618
        %v620 = vpop.xlane.xlu0 %619
        %v621 = vrcp.pop 32.0
        %v622 = vmul.f32 %v620, %v621
        %v623 = vmul.f32 %v537, %v537
        %v624 = vsel %vm617, %v623, 0.0
        %625 = vadd.xlane.f32.xlu0 %v624
        %v626 = vpop.xlane.xlu0 %625
        %v627 = vmul.f32 %v626, %v621
        %v628 = vmul.f32 %v622, %v622
        %v629 = vsub.f32 %v627, %v628
        %v630 = vsub.f32 %v537, %v622
        %v631 = vadd.f32 %v629, 1e-06
        %v632 = vrsqrt.pop %v631
        %v633 = vmul.f32 %v630, %v632
        %v634 = vlaneseq
        %v635 = vshrl.u32 %v634, 7
        %v636 = vsub.s32 0, %v635
        %v637 = vrot.slane %v538, %v636
        %v638 = vmul.f32 %v633, %v637
        %v639 = vlaneseq
        %v640 = vshrl.u32 %v639, 7
        %v641 = vsub.s32 1, %v640
        %v642 = vrot.slane %v538, %v641
        %v643 = vadd.f32 %v638, %v642
        %v644 = vpack.c.bf16 %v643, %v643
        %v645 = vld [vmem:[%s498] sm:$0xf]
        %v646 = vld [vmem:[%s498 + $0x4] sm:$0xf]
        %v647 = vld [vmem:[%s498 + $0x8] sm:$0xf]
        %v648 = vld [vmem:[%s498 + $0xc] sm:$0xf]
        %v649 = vld [vmem:[%s498 + $0x10] sm:$0xf]
        %v650 = vld [vmem:[%s498 + $0x14] sm:$0xf]
        %v651 = vld [vmem:[%s498 + $0x18] sm:$0xf]
        %v652 = vld [vmem:[%s498 + $0x1c] sm:$0xf]
        %v653 = vld [vmem:[%s498 + $0x20] sm:$0xf]
        %v654 = vld [vmem:[%s498 + $0x24] sm:$0xf]
        %v655 = vld [vmem:[%s498 + $0x28] sm:$0xf]
        %v656 = vld [vmem:[%s498 + $0x2c] sm:$0xf]
        %v657 = vld [vmem:[%s498 + $0x30] sm:$0xf]
        %v658 = vld [vmem:[%s498 + $0x34] sm:$0xf]
        %v659 = vld [vmem:[%s498 + $0x38] sm:$0xf]
        %v660 = vld [vmem:[%s498 + $0x3c] sm:$0xf]
        %v661 = vlaneseq
        %v662 = vshrl.u32 %v661, 7
        %v663 = vsub.s32 0, %v662
        %v664 = vrot.slane %v557, %v663
        %v665 = vlaneseq
        %v666 = vshrl.u32 %v665, 7
        %v667 = vsub.s32 0, %v666
        %v668 = vrot.slane %v564, %v667
        %v669 = vlaneseq
        %v670 = vshrl.u32 %v669, 7
        %v671 = vsub.s32 0, %v670
        %v672 = vrot.slane %v565, %v671
        %v673 = vlaneseq
        %v674 = vshrl.u32 %v673, 7
        %v675 = vsub.s32 0, %v674
        %v676 = vrot.slane %v566, %v675
        %v685 = vunpack.c.l.b16 %v645
        %v686 = vunpack.c.l.b16 %v646
        %v687 = vunpack.c.l.b16 %v647
        %v688 = vunpack.c.l.b16 %v648
        %v689 = vpack.c.b16 %v686, %v685
        %v690 = vpack.c.b16 %v688, %v687
        %v694 = vsel %vm617, %v644, 0
        %696 = vmatprep.subr.bf16.mxu0 0
        %697 = vmatpush1.bf16.msra.mxu0 %v689
        %698 = vmatprep.subr.bf16.mxu0 0
        %699 = vmatpush1.bf16.msra.mxu0 %v690
        %700 = vmatprep.subr.bf16.mxu0 0
        %701 = vmatpush1.bf16.msra.mxu0 0
        %702 = vmatprep.subr.bf16.mxu0 0
        %703 = vmatpush1.bf16.msra.mxu0 0
        %704 = vmatprep.subr.bf16.mxu0 0
        %705 = vmatpush1.bf16.msra.mxu0 0
        %706 = vmatprep.subr.bf16.mxu0 0
        %707 = vmatpush1.bf16.msra.mxu0 0
        %708 = vmatprep.subr.bf16.mxu0 0
        %709 = vmatpush1.bf16.msra.mxu0 0
        %710 = vmatprep.subr.bf16.mxu0 0
        %711 = vmatpush1.bf16.msra.mxu0 0
        %712 = vmatprep.subr.bf16.mxu0 0
        %713 = vmatpush1.bf16.msra.mxu0 0
        %714 = vmatprep.subr.bf16.mxu0 0
        %715 = vmatpush1.bf16.msra.mxu0 0
        %716 = vmatprep.subr.bf16.mxu0 0
        %717 = vmatpush1.bf16.msra.mxu0 0
        %718 = vmatprep.subr.bf16.mxu0 0
        %719 = vmatpush1.bf16.msra.mxu0 0
        %720 = vmatprep.subr.bf16.mxu0 0
        %721 = vmatpush1.bf16.msra.mxu0 0
        %722 = vmatprep.subr.bf16.mxu0 0
        %723 = vmatpush1.bf16.msra.mxu0 0
        %724 = vmatprep.subr.bf16.mxu0 0
        %725 = vmatpush1.bf16.msra.mxu0 0
        %726 = vmatprep.subr.bf16.mxu0 0
        %727 = vmatpush1.bf16.msra.mxu0 0
        %728 = vmatprep.mubr.bf16.mxu0 0
        %729 = vmatmul.mubr.bf16.gmra.mrb[0].mxu0 %v694
        %v730 = vpop.f32.mrb[0].mxu0
        %v731 = vadd.f32 %v664, %v730
        %v732 = vpop.f32.mrb[0].mxu0
        %v733 = vpop.f32.mrb[0].mxu0
        %v734 = vpop.f32.mrb[0].mxu0
        %735 = vdwg.mxu0
        %v740 = vunpack.c.l.b16 %v649
        %v741 = vunpack.c.l.b16 %v650
        %v742 = vunpack.c.l.b16 %v651
        %v743 = vunpack.c.l.b16 %v652
        %v744 = vpack.c.b16 %v741, %v740
        %v745 = vpack.c.b16 %v743, %v742
        %748 = vmatprep.subr.bf16.mxu0 0
        %749 = vmatpush1.bf16.msra.mxu0 %v744
        %750 = vmatprep.subr.bf16.mxu0 0
        %751 = vmatpush1.bf16.msra.mxu0 %v745
        %752 = vmatprep.subr.bf16.mxu0 0
        %753 = vmatpush1.bf16.msra.mxu0 0
        %754 = vmatprep.subr.bf16.mxu0 0
        %755 = vmatpush1.bf16.msra.mxu0 0
        %756 = vmatprep.subr.bf16.mxu0 0
        %757 = vmatpush1.bf16.msra.mxu0 0
        %758 = vmatprep.subr.bf16.mxu0 0
        %759 = vmatpush1.bf16.msra.mxu0 0
        %760 = vmatprep.subr.bf16.mxu0 0
        %761 = vmatpush1.bf16.msra.mxu0 0
        %762 = vmatprep.subr.bf16.mxu0 0
        %763 = vmatpush1.bf16.msra.mxu0 0
        %764 = vmatprep.subr.bf16.mxu0 0
        %765 = vmatpush1.bf16.msra.mxu0 0
        %766 = vmatprep.subr.bf16.mxu0 0
        %767 = vmatpush1.bf16.msra.mxu0 0
        %768 = vmatprep.subr.bf16.mxu0 0
        %769 = vmatpush1.bf16.msra.mxu0 0
        %770 = vmatprep.subr.bf16.mxu0 0
        %771 = vmatpush1.bf16.msra.mxu0 0
        %772 = vmatprep.subr.bf16.mxu0 0
        %773 = vmatpush1.bf16.msra.mxu0 0
        %774 = vmatprep.subr.bf16.mxu0 0
        %775 = vmatpush1.bf16.msra.mxu0 0
        %776 = vmatprep.subr.bf16.mxu0 0
        %777 = vmatpush1.bf16.msra.mxu0 0
        %778 = vmatprep.subr.bf16.mxu0 0
        %779 = vmatpush1.bf16.msra.mxu0 0
        %780 = vmatprep.mubr.bf16.mxu0 0
        %781 = vmatmul.mubr.bf16.gmra.mrb[0].mxu0 %v694
        %v782 = vpop.f32.mrb[0].mxu0
        %v783 = vadd.f32 %v668, %v782
        %v784 = vpop.f32.mrb[0].mxu0
        %v785 = vpop.f32.mrb[0].mxu0
        %v786 = vpop.f32.mrb[0].mxu0
        %787 = vdwg.mxu0
        %v792 = vunpack.c.l.b16 %v653
        %v793 = vunpack.c.l.b16 %v654
        %v794 = vunpack.c.l.b16 %v655
        %v795 = vunpack.c.l.b16 %v656
        %v796 = vpack.c.b16 %v793, %v792
        %v797 = vpack.c.b16 %v795, %v794
        %800 = vmatprep.subr.bf16.mxu0 0
        %801 = vmatpush1.bf16.msra.mxu0 %v796
        %802 = vmatprep.subr.bf16.mxu0 0
        %803 = vmatpush1.bf16.msra.mxu0 %v797
        %804 = vmatprep.subr.bf16.mxu0 0
        %805 = vmatpush1.bf16.msra.mxu0 0
        %806 = vmatprep.subr.bf16.mxu0 0
        %807 = vmatpush1.bf16.msra.mxu0 0
        %808 = vmatprep.subr.bf16.mxu0 0
        %809 = vmatpush1.bf16.msra.mxu0 0
        %810 = vmatprep.subr.bf16.mxu0 0
        %811 = vmatpush1.bf16.msra.mxu0 0
        %812 = vmatprep.subr.bf16.mxu0 0
        %813 = vmatpush1.bf16.msra.mxu0 0
        %814 = vmatprep.subr.bf16.mxu0 0
        %815 = vmatpush1.bf16.msra.mxu0 0
        %816 = vmatprep.subr.bf16.mxu0 0
        %817 = vmatpush1.bf16.msra.mxu0 0
        %818 = vmatprep.subr.bf16.mxu0 0
        %819 = vmatpush1.bf16.msra.mxu0 0
        %820 = vmatprep.subr.bf16.mxu0 0
        %821 = vmatpush1.bf16.msra.mxu0 0
        %822 = vmatprep.subr.bf16.mxu0 0
        %823 = vmatpush1.bf16.msra.mxu0 0
        %824 = vmatprep.subr.bf16.mxu0 0
        %825 = vmatpush1.bf16.msra.mxu0 0
        %826 = vmatprep.subr.bf16.mxu0 0
        %827 = vmatpush1.bf16.msra.mxu0 0
        %828 = vmatprep.subr.bf16.mxu0 0
        %829 = vmatpush1.bf16.msra.mxu0 0
        %830 = vmatprep.subr.bf16.mxu0 0
        %831 = vmatpush1.bf16.msra.mxu0 0
        %832 = vmatprep.mubr.bf16.mxu0 0
        %833 = vmatmul.mubr.bf16.gmra.mrb[0].mxu0 %v694
        %v834 = vpop.f32.mrb[0].mxu0
        %v835 = vadd.f32 %v672, %v834
        %v836 = vpop.f32.mrb[0].mxu0
        %v837 = vpop.f32.mrb[0].mxu0
        %v838 = vpop.f32.mrb[0].mxu0
        %839 = vdwg.mxu0
        %v844 = vunpack.c.l.b16 %v657
        %v845 = vunpack.c.l.b16 %v658
        %v846 = vunpack.c.l.b16 %v659
        %v847 = vunpack.c.l.b16 %v660
        %v848 = vpack.c.b16 %v845, %v844
        %v849 = vpack.c.b16 %v847, %v846
        %852 = vmatprep.subr.bf16.mxu0 0
        %853 = vmatpush1.bf16.msra.mxu0 %v848
        %854 = vmatprep.subr.bf16.mxu0 0
        %855 = vmatpush1.bf16.msra.mxu0 %v849
        %856 = vmatprep.subr.bf16.mxu0 0
        %857 = vmatpush1.bf16.msra.mxu0 0
        %858 = vmatprep.subr.bf16.mxu0 0
        %859 = vmatpush1.bf16.msra.mxu0 0
        %860 = vmatprep.subr.bf16.mxu0 0
        %861 = vmatpush1.bf16.msra.mxu0 0
        %862 = vmatprep.subr.bf16.mxu0 0
        %863 = vmatpush1.bf16.msra.mxu0 0
        %864 = vmatprep.subr.bf16.mxu0 0
        %865 = vmatpush1.bf16.msra.mxu0 0
        %866 = vmatprep.subr.bf16.mxu0 0
        %867 = vmatpush1.bf16.msra.mxu0 0
        %868 = vmatprep.subr.bf16.mxu0 0
        %869 = vmatpush1.bf16.msra.mxu0 0
        %870 = vmatprep.subr.bf16.mxu0 0
        %871 = vmatpush1.bf16.msra.mxu0 0
        %872 = vmatprep.subr.bf16.mxu0 0
        %873 = vmatpush1.bf16.msra.mxu0 0
        %874 = vmatprep.subr.bf16.mxu0 0
        %875 = vmatpush1.bf16.msra.mxu0 0
        %876 = vmatprep.subr.bf16.mxu0 0
        %877 = vmatpush1.bf16.msra.mxu0 0
        %878 = vmatprep.subr.bf16.mxu0 0
        %879 = vmatpush1.bf16.msra.mxu0 0
        %880 = vmatprep.subr.bf16.mxu0 0
        %881 = vmatpush1.bf16.msra.mxu0 0
        %882 = vmatprep.subr.bf16.mxu0 0
        %883 = vmatpush1.bf16.msra.mxu0 0
        %884 = vmatprep.mubr.bf16.mxu0 0
        %885 = vmatmul.mubr.bf16.gmra.mrb[0].mxu0 %v694
        %v886 = vpop.f32.mrb[0].mxu0
        %v887 = vadd.f32 %v676, %v886
        %v888 = vpop.f32.mrb[0].mxu0
        %v889 = vpop.f32.mrb[0].mxu0
        %v890 = vpop.f32.mrb[0].mxu0
        %891 = vdwg.mxu0
        %v892 = vld [vmem:[%s503] sm:$0xf]
        %v893 = vld [vmem:[%s503 + $0x4] sm:$0xf]
        %v894 = vld [vmem:[%s503 + $0x8] sm:$0xf]
        %v895 = vld [vmem:[%s503 + $0xc] sm:$0xf]
        %v896 = vld [vmem:[%s503 + $0x10] sm:$0xf]
        %v897 = vld [vmem:[%s503 + $0x14] sm:$0xf]
        %v898 = vld [vmem:[%s503 + $0x18] sm:$0xf]
        %v899 = vld [vmem:[%s503 + $0x1c] sm:$0xf]
        %v900 = vld [vmem:[%s503 + $0x20] sm:$0xf]
        %v901 = vld [vmem:[%s503 + $0x24] sm:$0xf]
        %v902 = vld [vmem:[%s503 + $0x28] sm:$0xf]
        %v903 = vld [vmem:[%s503 + $0x2c] sm:$0xf]
        %v904 = vld [vmem:[%s503 + $0x30] sm:$0xf]
        %v905 = vld [vmem:[%s503 + $0x34] sm:$0xf]
        %v906 = vld [vmem:[%s503 + $0x38] sm:$0xf]
        %v907 = vld [vmem:[%s503 + $0x3c] sm:$0xf]
        %v908 = vlaneseq
        %v909 = vshrl.u32 %v908, 7
        %v910 = vsub.s32 0, %v909
        %v911 = vrot.slane %v582, %v910
        %v912 = vlaneseq
        %v913 = vshrl.u32 %v912, 7
        %v914 = vsub.s32 0, %v913
        %v915 = vrot.slane %v589, %v914
        %v916 = vlaneseq
        %v917 = vshrl.u32 %v916, 7
        %v918 = vsub.s32 0, %v917
        %v919 = vrot.slane %v590, %v918
        %v920 = vlaneseq
        %v921 = vshrl.u32 %v920, 7
        %v922 = vsub.s32 0, %v921
        %v923 = vrot.slane %v591, %v922
        %v932 = vunpack.c.l.b16 %v892
        %v933 = vunpack.c.l.b16 %v893
        %v934 = vunpack.c.l.b16 %v894
        %v935 = vunpack.c.l.b16 %v895
        %v936 = vpack.c.b16 %v933, %v932
        %v937 = vpack.c.b16 %v935, %v934
        %940 = vmatprep.subr.bf16.mxu0 0
        %941 = vmatpush1.bf16.msra.mxu0 %v936
        %942 = vmatprep.subr.bf16.mxu0 0
        %943 = vmatpush1.bf16.msra.mxu0 %v937
        %944 = vmatprep.subr.bf16.mxu0 0
        %945 = vmatpush1.bf16.msra.mxu0 0
        %946 = vmatprep.subr.bf16.mxu0 0
        %947 = vmatpush1.bf16.msra.mxu0 0
        %948 = vmatprep.subr.bf16.mxu0 0
        %949 = vmatpush1.bf16.msra.mxu0 0
        %950 = vmatprep.subr.bf16.mxu0 0
        %951 = vmatpush1.bf16.msra.mxu0 0
        %952 = vmatprep.subr.bf16.mxu0 0
        %953 = vmatpush1.bf16.msra.mxu0 0
        %954 = vmatprep.subr.bf16.mxu0 0
        %955 = vmatpush1.bf16.msra.mxu0 0
        %956 = vmatprep.subr.bf16.mxu0 0
        %957 = vmatpush1.bf16.msra.mxu0 0
        %958 = vmatprep.subr.bf16.mxu0 0
        %959 = vmatpush1.bf16.msra.mxu0 0
        %960 = vmatprep.subr.bf16.mxu0 0
        %961 = vmatpush1.bf16.msra.mxu0 0
        %962 = vmatprep.subr.bf16.mxu0 0
        %963 = vmatpush1.bf16.msra.mxu0 0
        %964 = vmatprep.subr.bf16.mxu0 0
        %965 = vmatpush1.bf16.msra.mxu0 0
        %966 = vmatprep.subr.bf16.mxu0 0
        %967 = vmatpush1.bf16.msra.mxu0 0
        %968 = vmatprep.subr.bf16.mxu0 0
        %969 = vmatpush1.bf16.msra.mxu0 0
        %970 = vmatprep.subr.bf16.mxu0 0
        %971 = vmatpush1.bf16.msra.mxu0 0
        %972 = vmatprep.mubr.bf16.mxu0 0
        %973 = vmatmul.mubr.bf16.gmra.mrb[0].mxu0 %v694
        %v974 = vpop.f32.mrb[0].mxu0
        %v975 = vadd.f32 %v911, %v974
        %v976 = vpop.f32.mrb[0].mxu0
        %v977 = vpop.f32.mrb[0].mxu0
        %v978 = vpop.f32.mrb[0].mxu0
        %979 = vdwg.mxu0
        %v984 = vunpack.c.l.b16 %v896
        %v985 = vunpack.c.l.b16 %v897
        %v986 = vunpack.c.l.b16 %v898
        %v987 = vunpack.c.l.b16 %v899
        %v988 = vpack.c.b16 %v985, %v984
        %v989 = vpack.c.b16 %v987, %v986
        %992 = vmatprep.subr.bf16.mxu0 0
        %993 = vmatpush1.bf16.msra.mxu0 %v988
        %994 = vmatprep.subr.bf16.mxu0 0
        %995 = vmatpush1.bf16.msra.mxu0 %v989
        %996 = vmatprep.subr.bf16.mxu0 0
        %997 = vmatpush1.bf16.msra.mxu0 0
        %998 = vmatprep.subr.bf16.mxu0 0
        %999 = vmatpush1.bf16.msra.mxu0 0
        %1000 = vmatprep.subr.bf16.mxu0 0
        %1001 = vmatpush1.bf16.msra.mxu0 0
        %1002 = vmatprep.subr.bf16.mxu0 0
        %1003 = vmatpush1.bf16.msra.mxu0 0
        %1004 = vmatprep.subr.bf16.mxu0 0
        %1005 = vmatpush1.bf16.msra.mxu0 0
        %1006 = vmatprep.subr.bf16.mxu0 0
        %1007 = vmatpush1.bf16.msra.mxu0 0
        %1008 = vmatprep.subr.bf16.mxu0 0
        %1009 = vmatpush1.bf16.msra.mxu0 0
        %1010 = vmatprep.subr.bf16.mxu0 0
        %1011 = vmatpush1.bf16.msra.mxu0 0
        %1012 = vmatprep.subr.bf16.mxu0 0
        %1013 = vmatpush1.bf16.msra.mxu0 0
        %1014 = vmatprep.subr.bf16.mxu0 0
        %1015 = vmatpush1.bf16.msra.mxu0 0
        %1016 = vmatprep.subr.bf16.mxu0 0
        %1017 = vmatpush1.bf16.msra.mxu0 0
        %1018 = vmatprep.subr.bf16.mxu0 0
        %1019 = vmatpush1.bf16.msra.mxu0 0
        %1020 = vmatprep.subr.bf16.mxu0 0
        %1021 = vmatpush1.bf16.msra.mxu0 0
        %1022 = vmatprep.subr.bf16.mxu0 0
        %1023 = vmatpush1.bf16.msra.mxu0 0
        %1024 = vmatprep.mubr.bf16.mxu0 0
        %1025 = vmatmul.mubr.bf16.gmra.mrb[0].mxu0 %v694
        %v1026 = vpop.f32.mrb[0].mxu0
        %v1027 = vadd.f32 %v915, %v1026
        %v1028 = vpop.f32.mrb[0].mxu0
        %v1029 = vpop.f32.mrb[0].mxu0
        %v1030 = vpop.f32.mrb[0].mxu0
        %1031 = vdwg.mxu0
        %v1036 = vunpack.c.l.b16 %v900
        %v1037 = vunpack.c.l.b16 %v901
        %v1038 = vunpack.c.l.b16 %v902
        %v1039 = vunpack.c.l.b16 %v903
        %v1040 = vpack.c.b16 %v1037, %v1036
        %v1041 = vpack.c.b16 %v1039, %v1038
        %1044 = vmatprep.subr.bf16.mxu0 0
        %1045 = vmatpush1.bf16.msra.mxu0 %v1040
        %1046 = vmatprep.subr.bf16.mxu0 0
        %1047 = vmatpush1.bf16.msra.mxu0 %v1041
        %1048 = vmatprep.subr.bf16.mxu0 0
        %1049 = vmatpush1.bf16.msra.mxu0 0
        %1050 = vmatprep.subr.bf16.mxu0 0
        %1051 = vmatpush1.bf16.msra.mxu0 0
        %1052 = vmatprep.subr.bf16.mxu0 0
        %1053 = vmatpush1.bf16.msra.mxu0 0
        %1054 = vmatprep.subr.bf16.mxu0 0
        %1055 = vmatpush1.bf16.msra.mxu0 0
        %1056 = vmatprep.subr.bf16.mxu0 0
        %1057 = vmatpush1.bf16.msra.mxu0 0
        %1058 = vmatprep.subr.bf16.mxu0 0
        %1059 = vmatpush1.bf16.msra.mxu0 0
        %1060 = vmatprep.subr.bf16.mxu0 0
        %1061 = vmatpush1.bf16.msra.mxu0 0
        %1062 = vmatprep.subr.bf16.mxu0 0
        %1063 = vmatpush1.bf16.msra.mxu0 0
        %1064 = vmatprep.subr.bf16.mxu0 0
        %1065 = vmatpush1.bf16.msra.mxu0 0
        %1066 = vmatprep.subr.bf16.mxu0 0
        %1067 = vmatpush1.bf16.msra.mxu0 0
        %1068 = vmatprep.subr.bf16.mxu0 0
        %1069 = vmatpush1.bf16.msra.mxu0 0
        %1070 = vmatprep.subr.bf16.mxu0 0
        %1071 = vmatpush1.bf16.msra.mxu0 0
        %1072 = vmatprep.subr.bf16.mxu0 0
        %1073 = vmatpush1.bf16.msra.mxu0 0
        %1074 = vmatprep.subr.bf16.mxu0 0
        %1075 = vmatpush1.bf16.msra.mxu0 0
        %1076 = vmatprep.mubr.bf16.mxu0 0
        %1077 = vmatmul.mubr.bf16.gmra.mrb[0].mxu0 %v694
        %v1078 = vpop.f32.mrb[0].mxu0
        %v1079 = vadd.f32 %v919, %v1078
        %v1080 = vpop.f32.mrb[0].mxu0
        %v1081 = vpop.f32.mrb[0].mxu0
        %v1082 = vpop.f32.mrb[0].mxu0
        %1083 = vdwg.mxu0
        %v1088 = vunpack.c.l.b16 %v904
        %v1089 = vunpack.c.l.b16 %v905
        %v1090 = vunpack.c.l.b16 %v906
        %v1091 = vunpack.c.l.b16 %v907
        %v1092 = vpack.c.b16 %v1089, %v1088
        %v1093 = vpack.c.b16 %v1091, %v1090
        %1096 = vmatprep.subr.bf16.mxu0 0
        %1097 = vmatpush1.bf16.msra.mxu0 %v1092
        %1098 = vmatprep.subr.bf16.mxu0 0
        %1099 = vmatpush1.bf16.msra.mxu0 %v1093
        %1100 = vmatprep.subr.bf16.mxu0 0
        %1101 = vmatpush1.bf16.msra.mxu0 0
        %1102 = vmatprep.subr.bf16.mxu0 0
        %1103 = vmatpush1.bf16.msra.mxu0 0
        %1104 = vmatprep.subr.bf16.mxu0 0
        %1105 = vmatpush1.bf16.msra.mxu0 0
        %1106 = vmatprep.subr.bf16.mxu0 0
        %1107 = vmatpush1.bf16.msra.mxu0 0
        %1108 = vmatprep.subr.bf16.mxu0 0
        %1109 = vmatpush1.bf16.msra.mxu0 0
        %1110 = vmatprep.subr.bf16.mxu0 0
        %1111 = vmatpush1.bf16.msra.mxu0 0
        %1112 = vmatprep.subr.bf16.mxu0 0
        %1113 = vmatpush1.bf16.msra.mxu0 0
        %1114 = vmatprep.subr.bf16.mxu0 0
        %1115 = vmatpush1.bf16.msra.mxu0 0
        %1116 = vmatprep.subr.bf16.mxu0 0
        %1117 = vmatpush1.bf16.msra.mxu0 0
        %1118 = vmatprep.subr.bf16.mxu0 0
        %1119 = vmatpush1.bf16.msra.mxu0 0
        %1120 = vmatprep.subr.bf16.mxu0 0
        %1121 = vmatpush1.bf16.msra.mxu0 0
        %1122 = vmatprep.subr.bf16.mxu0 0
        %1123 = vmatpush1.bf16.msra.mxu0 0
        %1124 = vmatprep.subr.bf16.mxu0 0
        %1125 = vmatpush1.bf16.msra.mxu0 0
        %1126 = vmatprep.subr.bf16.mxu0 0
        %1127 = vmatpush1.bf16.msra.mxu0 0
        %1128 = vmatprep.mubr.bf16.mxu0 0
        %1129 = vmatmul.mubr.bf16.gmra.mrb[0].mxu0 %v694
        %v1130 = vpop.f32.mrb[0].mxu0
        %v1131 = vadd.f32 %v923, %v1130
        %v1132 = vpop.f32.mrb[0].mxu0
        %v1133 = vpop.f32.mrb[0].mxu0
        %v1134 = vpop.f32.mrb[0].mxu0
        %1135 = vdwg.mxu0
        %v1136 = vld [vmem:[%s508] sm:$0xf]
        %v1137 = vld [vmem:[%s508 + $0x4] sm:$0xf]
        %v1138 = vld [vmem:[%s508 + $0x8] sm:$0xf]
        %v1139 = vld [vmem:[%s508 + $0xc] sm:$0xf]
        %v1140 = vld [vmem:[%s508 + $0x10] sm:$0xf]
        %v1141 = vld [vmem:[%s508 + $0x14] sm:$0xf]
        %v1142 = vld [vmem:[%s508 + $0x18] sm:$0xf]
        %v1143 = vld [vmem:[%s508 + $0x1c] sm:$0xf]
        %v1144 = vld [vmem:[%s508 + $0x20] sm:$0xf]
        %v1145 = vld [vmem:[%s508 + $0x24] sm:$0xf]
        %v1146 = vld [vmem:[%s508 + $0x28] sm:$0xf]
        %v1147 = vld [vmem:[%s508 + $0x2c] sm:$0xf]
        %v1148 = vld [vmem:[%s508 + $0x30] sm:$0xf]
        %v1149 = vld [vmem:[%s508 + $0x34] sm:$0xf]
        %v1150 = vld [vmem:[%s508 + $0x38] sm:$0xf]
        %v1151 = vld [vmem:[%s508 + $0x3c] sm:$0xf]
        %v1152 = vlaneseq
        %v1153 = vshrl.u32 %v1152, 7
        %v1154 = vsub.s32 0, %v1153
        %v1155 = vrot.slane %v607, %v1154
        %v1156 = vlaneseq
        %v1157 = vshrl.u32 %v1156, 7
        %v1158 = vsub.s32 0, %v1157
        %v1159 = vrot.slane %v614, %v1158
        %v1160 = vlaneseq
        %v1161 = vshrl.u32 %v1160, 7
        %v1162 = vsub.s32 0, %v1161
        %v1163 = vrot.slane %v615, %v1162
        %v1164 = vlaneseq
        %v1165 = vshrl.u32 %v1164, 7
        %v1166 = vsub.s32 0, %v1165
        %v1167 = vrot.slane %v616, %v1166
        %v1176 = vunpack.c.l.b16 %v1136
        %v1177 = vunpack.c.l.b16 %v1137
        %v1178 = vunpack.c.l.b16 %v1138
        %v1179 = vunpack.c.l.b16 %v1139
        %v1180 = vpack.c.b16 %v1177, %v1176
        %v1181 = vpack.c.b16 %v1179, %v1178
        %1184 = vmatprep.subr.bf16.mxu0 0
        %1185 = vmatpush1.bf16.msra.mxu0 %v1180
        %1186 = vmatprep.subr.bf16.mxu0 0
        %1187 = vmatpush1.bf16.msra.mxu0 %v1181
        %1188 = vmatprep.subr.bf16.mxu0 0
        %1189 = vmatpush1.bf16.msra.mxu0 0
        %1190 = vmatprep.subr.bf16.mxu0 0
        %1191 = vmatpush1.bf16.msra.mxu0 0
        %1192 = vmatprep.subr.bf16.mxu0 0
        %1193 = vmatpush1.bf16.msra.mxu0 0
        %1194 = vmatprep.subr.bf16.mxu0 0
        %1195 = vmatpush1.bf16.msra.mxu0 0
        %1196 = vmatprep.subr.bf16.mxu0 0
        %1197 = vmatpush1.bf16.msra.mxu0 0
        %1198 = vmatprep.subr.bf16.mxu0 0
        %1199 = vmatpush1.bf16.msra.mxu0 0
        %1200 = vmatprep.subr.bf16.mxu0 0
        %1201 = vmatpush1.bf16.msra.mxu0 0
        %1202 = vmatprep.subr.bf16.mxu0 0
        %1203 = vmatpush1.bf16.msra.mxu0 0
        %1204 = vmatprep.subr.bf16.mxu0 0
        %1205 = vmatpush1.bf16.msra.mxu0 0
        %1206 = vmatprep.subr.bf16.mxu0 0
        %1207 = vmatpush1.bf16.msra.mxu0 0
        %1208 = vmatprep.subr.bf16.mxu0 0
        %1209 = vmatpush1.bf16.msra.mxu0 0
        %1210 = vmatprep.subr.bf16.mxu0 0
        %1211 = vmatpush1.bf16.msra.mxu0 0
        %1212 = vmatprep.subr.bf16.mxu0 0
        %1213 = vmatpush1.bf16.msra.mxu0 0
        %1214 = vmatprep.subr.bf16.mxu0 0
        %1215 = vmatpush1.bf16.msra.mxu0 0
        %1216 = vmatprep.mubr.bf16.mxu0 0
        %1217 = vmatmul.mubr.bf16.gmra.mrb[0].mxu0 %v694
        %v1218 = vpop.f32.mrb[0].mxu0
        %v1219 = vadd.f32 %v1155, %v1218
        %v1220 = vpop.f32.mrb[0].mxu0
        %v1221 = vpop.f32.mrb[0].mxu0
        %v1222 = vpop.f32.mrb[0].mxu0
        %1223 = vdwg.mxu0
        %v1228 = vunpack.c.l.b16 %v1140
        %v1229 = vunpack.c.l.b16 %v1141
        %v1230 = vunpack.c.l.b16 %v1142
        %v1231 = vunpack.c.l.b16 %v1143
        %v1232 = vpack.c.b16 %v1229, %v1228
        %v1233 = vpack.c.b16 %v1231, %v1230
        %1236 = vmatprep.subr.bf16.mxu0 0
        %1237 = vmatpush1.bf16.msra.mxu0 %v1232
        %1238 = vmatprep.subr.bf16.mxu0 0
        %1239 = vmatpush1.bf16.msra.mxu0 %v1233
        %1240 = vmatprep.subr.bf16.mxu0 0
        %1241 = vmatpush1.bf16.msra.mxu0 0
        %1242 = vmatprep.subr.bf16.mxu0 0
        %1243 = vmatpush1.bf16.msra.mxu0 0
        %1244 = vmatprep.subr.bf16.mxu0 0
        %1245 = vmatpush1.bf16.msra.mxu0 0
        %1246 = vmatprep.subr.bf16.mxu0 0
        %1247 = vmatpush1.bf16.msra.mxu0 0
        %1248 = vmatprep.subr.bf16.mxu0 0
        %1249 = vmatpush1.bf16.msra.mxu0 0
        %1250 = vmatprep.subr.bf16.mxu0 0
        %1251 = vmatpush1.bf16.msra.mxu0 0
        %1252 = vmatprep.subr.bf16.mxu0 0
        %1253 = vmatpush1.bf16.msra.mxu0 0
        %1254 = vmatprep.subr.bf16.mxu0 0
        %1255 = vmatpush1.bf16.msra.mxu0 0
        %1256 = vmatprep.subr.bf16.mxu0 0
        %1257 = vmatpush1.bf16.msra.mxu0 0
        %1258 = vmatprep.subr.bf16.mxu0 0
        %1259 = vmatpush1.bf16.msra.mxu0 0
        %1260 = vmatprep.subr.bf16.mxu0 0
        %1261 = vmatpush1.bf16.msra.mxu0 0
        %1262 = vmatprep.subr.bf16.mxu0 0
        %1263 = vmatpush1.bf16.msra.mxu0 0
        %1264 = vmatprep.subr.bf16.mxu0 0
        %1265 = vmatpush1.bf16.msra.mxu0 0
        %1266 = vmatprep.subr.bf16.mxu0 0
        %1267 = vmatpush1.bf16.msra.mxu0 0
        %1268 = vmatprep.mubr.bf16.mxu0 0
        %1269 = vmatmul.mubr.bf16.gmra.mrb[0].mxu0 %v694
        %v1270 = vpop.f32.mrb[0].mxu0
        %v1271 = vadd.f32 %v1159, %v1270
        %v1272 = vpop.f32.mrb[0].mxu0
        %v1273 = vpop.f32.mrb[0].mxu0
        %v1274 = vpop.f32.mrb[0].mxu0
        %1275 = vdwg.mxu0
        %v1280 = vunpack.c.l.b16 %v1144
        %v1281 = vunpack.c.l.b16 %v1145
        %v1282 = vunpack.c.l.b16 %v1146
        %v1283 = vunpack.c.l.b16 %v1147
        %v1284 = vpack.c.b16 %v1281, %v1280
        %v1285 = vpack.c.b16 %v1283, %v1282
        %1288 = vmatprep.subr.bf16.mxu0 0
        %1289 = vmatpush1.bf16.msra.mxu0 %v1284
        %1290 = vmatprep.subr.bf16.mxu0 0
        %1291 = vmatpush1.bf16.msra.mxu0 %v1285
        %1292 = vmatprep.subr.bf16.mxu0 0
        %1293 = vmatpush1.bf16.msra.mxu0 0
        %1294 = vmatprep.subr.bf16.mxu0 0
        %1295 = vmatpush1.bf16.msra.mxu0 0
        %1296 = vmatprep.subr.bf16.mxu0 0
        %1297 = vmatpush1.bf16.msra.mxu0 0
        %1298 = vmatprep.subr.bf16.mxu0 0
        %1299 = vmatpush1.bf16.msra.mxu0 0
        %1300 = vmatprep.subr.bf16.mxu0 0
        %1301 = vmatpush1.bf16.msra.mxu0 0
        %1302 = vmatprep.subr.bf16.mxu0 0
        %1303 = vmatpush1.bf16.msra.mxu0 0
        %1304 = vmatprep.subr.bf16.mxu0 0
        %1305 = vmatpush1.bf16.msra.mxu0 0
        %1306 = vmatprep.subr.bf16.mxu0 0
        %1307 = vmatpush1.bf16.msra.mxu0 0
        %1308 = vmatprep.subr.bf16.mxu0 0
        %1309 = vmatpush1.bf16.msra.mxu0 0
        %1310 = vmatprep.subr.bf16.mxu0 0
        %1311 = vmatpush1.bf16.msra.mxu0 0
        %1312 = vmatprep.subr.bf16.mxu0 0
        %1313 = vmatpush1.bf16.msra.mxu0 0
        %1314 = vmatprep.subr.bf16.mxu0 0
        %1315 = vmatpush1.bf16.msra.mxu0 0
        %1316 = vmatprep.subr.bf16.mxu0 0
        %1317 = vmatpush1.bf16.msra.mxu0 0
        %1318 = vmatprep.subr.bf16.mxu0 0
        %1319 = vmatpush1.bf16.msra.mxu0 0
        %1320 = vmatprep.mubr.bf16.mxu0 0
        %1321 = vmatmul.mubr.bf16.gmra.mrb[0].mxu0 %v694
        %v1322 = vpop.f32.mrb[0].mxu0
        %v1323 = vadd.f32 %v1163, %v1322
        %v1324 = vpop.f32.mrb[0].mxu0
        %v1325 = vpop.f32.mrb[0].mxu0
        %v1326 = vpop.f32.mrb[0].mxu0
        %1327 = vdwg.mxu0
        %v1332 = vunpack.c.l.b16 %v1148
        %v1333 = vunpack.c.l.b16 %v1149
        %v1334 = vunpack.c.l.b16 %v1150
        %v1335 = vunpack.c.l.b16 %v1151
        %v1336 = vpack.c.b16 %v1333, %v1332
        %v1337 = vpack.c.b16 %v1335, %v1334
        %1340 = vmatprep.subr.bf16.mxu0 0
        %1341 = vmatpush1.bf16.msra.mxu0 %v1336
        %1342 = vmatprep.subr.bf16.mxu0 0
        %1343 = vmatpush1.bf16.msra.mxu0 %v1337
        %1344 = vmatprep.subr.bf16.mxu0 0
        %1345 = vmatpush1.bf16.msra.mxu0 0
        %1346 = vmatprep.subr.bf16.mxu0 0
        %1347 = vmatpush1.bf16.msra.mxu0 0
        %1348 = vmatprep.subr.bf16.mxu0 0
        %1349 = vmatpush1.bf16.msra.mxu0 0
        %1350 = vmatprep.subr.bf16.mxu0 0
        %1351 = vmatpush1.bf16.msra.mxu0 0
        %1352 = vmatprep.subr.bf16.mxu0 0
        %1353 = vmatpush1.bf16.msra.mxu0 0
        %1354 = vmatprep.subr.bf16.mxu0 0
        %1355 = vmatpush1.bf16.msra.mxu0 0
        %1356 = vmatprep.subr.bf16.mxu0 0
        %1357 = vmatpush1.bf16.msra.mxu0 0
        %1358 = vmatprep.subr.bf16.mxu0 0
        %1359 = vmatpush1.bf16.msra.mxu0 0
        %1360 = vmatprep.subr.bf16.mxu0 0
        %1361 = vmatpush1.bf16.msra.mxu0 0
        %1362 = vmatprep.subr.bf16.mxu0 0
        %1363 = vmatpush1.bf16.msra.mxu0 0
        %1364 = vmatprep.subr.bf16.mxu0 0
        %1365 = vmatpush1.bf16.msra.mxu0 0
        %1366 = vmatprep.subr.bf16.mxu0 0
        %1367 = vmatpush1.bf16.msra.mxu0 0
        %1368 = vmatprep.subr.bf16.mxu0 0
        %1369 = vmatpush1.bf16.msra.mxu0 0
        %1370 = vmatprep.subr.bf16.mxu0 0
        %1371 = vmatpush1.bf16.msra.mxu0 0
        %1372 = vmatprep.mubr.bf16.mxu0 0
        %1373 = vmatmul.mubr.bf16.gmra.mrb[0].mxu0 %v694
        %v1374 = vpop.f32.mrb[0].mxu0
        %v1375 = vadd.f32 %v1167, %v1374
        %v1376 = vpop.f32.mrb[0].mxu0
        %v1377 = vpop.f32.mrb[0].mxu0
        %v1378 = vpop.f32.mrb[0].mxu0
        %1379 = vdwg.mxu0
        %v1380 = vpack.c.bf16 %v731, %v731
        %v1381 = vpack.c.bf16 %v783, %v783
        %v1382 = vpack.c.bf16 %v835, %v835
        %v1383 = vpack.c.bf16 %v887, %v887
        %v1384 = vpack.c.bf16 %v975, %v975
        %v1385 = vpack.c.bf16 %v1027, %v1027
        %v1386 = vpack.c.bf16 %v1079, %v1079
        %v1387 = vpack.c.bf16 %v1131, %v1131
        %vm1388 = vcmask 64512
        %v1390 = vsel %vm1388, %v1380, 0
        %v1393 = vsel %vm1388, %v1384, 0
        %1395 = vmatprep.subr.bf16.mxu0 0
        %1396 = vmatpush1.bf16.xpose.msra.mxu0 %v1393
        %1397 = vmatprep.subr.bf16.mxu0 0
        %1398 = vmatpush1.bf16.xpose.msra.mxu0 0
        %1399 = vmatprep.subr.bf16.mxu0 0
        %1400 = vmatpush1.bf16.xpose.msra.mxu0 0
        %1401 = vmatprep.subr.bf16.mxu0 0
        %1402 = vmatpush1.bf16.xpose.msra.mxu0 0
        %1403 = vmatprep.subr.bf16.mxu0 0
        %1404 = vmatpush1.bf16.xpose.msra.mxu0 0
        %1405 = vmatprep.subr.bf16.mxu0 0
        %1406 = vmatpush1.bf16.xpose.msra.mxu0 0
        %1407 = vmatprep.subr.bf16.mxu0 0
        %1408 = vmatpush1.bf16.xpose.msra.mxu0 0
        %1409 = vmatprep.subr.bf16.mxu0 0
        %1410 = vmatpush1.bf16.xpose.msra.mxu0 0
        %1411 = vmatprep.subr.bf16.mxu0 0
        %1412 = vmatpush1.bf16.xpose.msra.mxu0 0
        %1413 = vmatprep.subr.bf16.mxu0 0
        %1414 = vmatpush1.bf16.xpose.msra.mxu0 0
        %1415 = vmatprep.subr.bf16.mxu0 0
        %1416 = vmatpush1.bf16.xpose.msra.mxu0 0
        %1417 = vmatprep.subr.bf16.mxu0 0
        %1418 = vmatpush1.bf16.xpose.msra.mxu0 0
        %1419 = vmatprep.subr.bf16.mxu0 0
        %1420 = vmatpush1.bf16.xpose.msra.mxu0 0
        %1421 = vmatprep.subr.bf16.mxu0 0
        %1422 = vmatpush1.bf16.xpose.msra.mxu0 0
        %1423 = vmatprep.subr.bf16.mxu0 0
        %1424 = vmatpush1.bf16.xpose.msra.mxu0 0
        %1425 = vmatprep.subr.bf16.mxu0 0
        %1426 = vmatpush1.bf16.xpose.msra.mxu0 0
        %1427 = vmatprep.mubr.bf16.mxu0 0
        %1428 = vmatmul.mubr.bf16.gmra.mrb[0].mxu0 %v1390
        %v1429 = vpop.f32.mrb[0].mxu0
        %v1430 = vadd.f32 0.0, %v1429
        %v1431 = vpop.f32.mrb[0].mxu0
        %v1432 = vpop.f32.mrb[0].mxu0
        %v1433 = vpop.f32.mrb[0].mxu0
        %1434 = vdwg.mxu0
        %v1436 = vsel %vm1388, %v1381, 0
        %v1439 = vsel %vm1388, %v1385, 0
        %1441 = vmatprep.subr.bf16.mxu0 0
        %1442 = vmatpush1.bf16.xpose.msra.mxu0 %v1439
        %1443 = vmatprep.subr.bf16.mxu0 0
        %1444 = vmatpush1.bf16.xpose.msra.mxu0 0
        %1445 = vmatprep.subr.bf16.mxu0 0
        %1446 = vmatpush1.bf16.xpose.msra.mxu0 0
        %1447 = vmatprep.subr.bf16.mxu0 0
        %1448 = vmatpush1.bf16.xpose.msra.mxu0 0
        %1449 = vmatprep.subr.bf16.mxu0 0
        %1450 = vmatpush1.bf16.xpose.msra.mxu0 0
        %1451 = vmatprep.subr.bf16.mxu0 0
        %1452 = vmatpush1.bf16.xpose.msra.mxu0 0
        %1453 = vmatprep.subr.bf16.mxu0 0
        %1454 = vmatpush1.bf16.xpose.msra.mxu0 0
        %1455 = vmatprep.subr.bf16.mxu0 0
        %1456 = vmatpush1.bf16.xpose.msra.mxu0 0
        %1457 = vmatprep.subr.bf16.mxu0 0
        %1458 = vmatpush1.bf16.xpose.msra.mxu0 0
        %1459 = vmatprep.subr.bf16.mxu0 0
        %1460 = vmatpush1.bf16.xpose.msra.mxu0 0
        %1461 = vmatprep.subr.bf16.mxu0 0
        %1462 = vmatpush1.bf16.xpose.msra.mxu0 0
        %1463 = vmatprep.subr.bf16.mxu0 0
        %1464 = vmatpush1.bf16.xpose.msra.mxu0 0
        %1465 = vmatprep.subr.bf16.mxu0 0
        %1466 = vmatpush1.bf16.xpose.msra.mxu0 0
        %1467 = vmatprep.subr.bf16.mxu0 0
        %1468 = vmatpush1.bf16.xpose.msra.mxu0 0
        %1469 = vmatprep.subr.bf16.mxu0 0
        %1470 = vmatpush1.bf16.xpose.msra.mxu0 0
        %1471 = vmatprep.subr.bf16.mxu0 0
        %1472 = vmatpush1.bf16.xpose.msra.mxu0 0
        %1473 = vmatprep.mubr.bf16.mxu0 0
        %1474 = vmatmul.mubr.bf16.gmra.mrb[0].mxu0 %v1436
        %v1475 = vpop.f32.mrb[0].mxu0
        %v1476 = vadd.f32 0.0, %v1475
        %v1477 = vpop.f32.mrb[0].mxu0
        %v1478 = vpop.f32.mrb[0].mxu0
        %v1479 = vpop.f32.mrb[0].mxu0
        %1480 = vdwg.mxu0
        %v1482 = vsel %vm1388, %v1382, 0
        %v1485 = vsel %vm1388, %v1386, 0
        %1487 = vmatprep.subr.bf16.mxu0 0
        %1488 = vmatpush1.bf16.xpose.msra.mxu0 %v1485
        %1489 = vmatprep.subr.bf16.mxu0 0
        %1490 = vmatpush1.bf16.xpose.msra.mxu0 0
        %1491 = vmatprep.subr.bf16.mxu0 0
        %1492 = vmatpush1.bf16.xpose.msra.mxu0 0
        %1493 = vmatprep.subr.bf16.mxu0 0
        %1494 = vmatpush1.bf16.xpose.msra.mxu0 0
        %1495 = vmatprep.subr.bf16.mxu0 0
        %1496 = vmatpush1.bf16.xpose.msra.mxu0 0
        %1497 = vmatprep.subr.bf16.mxu0 0
        %1498 = vmatpush1.bf16.xpose.msra.mxu0 0
        %1499 = vmatprep.subr.bf16.mxu0 0
        %1500 = vmatpush1.bf16.xpose.msra.mxu0 0
        %1501 = vmatprep.subr.bf16.mxu0 0
        %1502 = vmatpush1.bf16.xpose.msra.mxu0 0
        %1503 = vmatprep.subr.bf16.mxu0 0
        %1504 = vmatpush1.bf16.xpose.msra.mxu0 0
        %1505 = vmatprep.subr.bf16.mxu0 0
        %1506 = vmatpush1.bf16.xpose.msra.mxu0 0
        %1507 = vmatprep.subr.bf16.mxu0 0
        %1508 = vmatpush1.bf16.xpose.msra.mxu0 0
        %1509 = vmatprep.subr.bf16.mxu0 0
        %1510 = vmatpush1.bf16.xpose.msra.mxu0 0
        %1511 = vmatprep.subr.bf16.mxu0 0
        %1512 = vmatpush1.bf16.xpose.msra.mxu0 0
        %1513 = vmatprep.subr.bf16.mxu0 0
        %1514 = vmatpush1.bf16.xpose.msra.mxu0 0
        %1515 = vmatprep.subr.bf16.mxu0 0
        %1516 = vmatpush1.bf16.xpose.msra.mxu0 0
        %1517 = vmatprep.subr.bf16.mxu0 0
        %1518 = vmatpush1.bf16.xpose.msra.mxu0 0
        %1519 = vmatprep.mubr.bf16.mxu0 0
        %1520 = vmatmul.mubr.bf16.gmra.mrb[0].mxu0 %v1482
        %v1521 = vpop.f32.mrb[0].mxu0
        %v1522 = vadd.f32 0.0, %v1521
        %v1523 = vpop.f32.mrb[0].mxu0
        %v1524 = vpop.f32.mrb[0].mxu0
        %v1525 = vpop.f32.mrb[0].mxu0
        %1526 = vdwg.mxu0
        %v1528 = vsel %vm1388, %v1383, 0
        %v1531 = vsel %vm1388, %v1387, 0
        %1533 = vmatprep.subr.bf16.mxu0 0
        %1534 = vmatpush1.bf16.xpose.msra.mxu0 %v1531
        %1535 = vmatprep.subr.bf16.mxu0 0
        %1536 = vmatpush1.bf16.xpose.msra.mxu0 0
        %1537 = vmatprep.subr.bf16.mxu0 0
        %1538 = vmatpush1.bf16.xpose.msra.mxu0 0
        %1539 = vmatprep.subr.bf16.mxu0 0
        %1540 = vmatpush1.bf16.xpose.msra.mxu0 0
        %1541 = vmatprep.subr.bf16.mxu0 0
        %1542 = vmatpush1.bf16.xpose.msra.mxu0 0
        %1543 = vmatprep.subr.bf16.mxu0 0
        %1544 = vmatpush1.bf16.xpose.msra.mxu0 0
        %1545 = vmatprep.subr.bf16.mxu0 0
        %1546 = vmatpush1.bf16.xpose.msra.mxu0 0
        %1547 = vmatprep.subr.bf16.mxu0 0
        %1548 = vmatpush1.bf16.xpose.msra.mxu0 0
        %1549 = vmatprep.subr.bf16.mxu0 0
        %1550 = vmatpush1.bf16.xpose.msra.mxu0 0
        %1551 = vmatprep.subr.bf16.mxu0 0
        %1552 = vmatpush1.bf16.xpose.msra.mxu0 0
        %1553 = vmatprep.subr.bf16.mxu0 0
        %1554 = vmatpush1.bf16.xpose.msra.mxu0 0
        %1555 = vmatprep.subr.bf16.mxu0 0
        %1556 = vmatpush1.bf16.xpose.msra.mxu0 0
        %1557 = vmatprep.subr.bf16.mxu0 0
        %1558 = vmatpush1.bf16.xpose.msra.mxu0 0
        %1559 = vmatprep.subr.bf16.mxu0 0
        %1560 = vmatpush1.bf16.xpose.msra.mxu0 0
        %1561 = vmatprep.subr.bf16.mxu0 0
        %1562 = vmatpush1.bf16.xpose.msra.mxu0 0
        %1563 = vmatprep.subr.bf16.mxu0 0
        %1564 = vmatpush1.bf16.xpose.msra.mxu0 0
        %1565 = vmatprep.mubr.bf16.mxu0 0
        %1566 = vmatmul.mubr.bf16.gmra.mrb[0].mxu0 %v1528
        %v1567 = vpop.f32.mrb[0].mxu0
        %v1568 = vadd.f32 0.0, %v1567
        %v1569 = vpop.f32.mrb[0].mxu0
        %v1570 = vpop.f32.mrb[0].mxu0
        %v1571 = vpop.f32.mrb[0].mxu0
        %1572 = vdwg.mxu0
        %v1573 = vmul.f32 %v1430, 0.35355338
        %v1574 = vmul.f32 %v1476, 0.35355338
        %v1575 = vmul.f32 %v1522, 0.35355338
        %v1576 = vmul.f32 %v1568, 0.35355338
        %v1577 = vsel %vm1388, %v1573, -inf
        %1578 = vmax.xlane.f32.xlu0 %v1577
        %v1579 = vpop.xlane.xlu0 %1578
        %v1580 = vsel %vm1388, %v1574, -inf
        %1581 = vmax.xlane.f32.xlu0 %v1580
        %v1582 = vpop.xlane.xlu0 %1581
        %v1583 = vsel %vm1388, %v1575, -inf
        %1584 = vmax.xlane.f32.xlu0 %v1583
        %v1585 = vpop.xlane.xlu0 %1584
        %v1586 = vsel %vm1388, %v1576, -inf
        %1587 = vmax.xlane.f32.xlu0 %v1586
        %v1588 = vpop.xlane.xlu0 %1587
        %v1589 = vsub.f32 %v1573, %v1579
        %v1590 = vsub.f32 %v1574, %v1582
        %v1591 = vsub.f32 %v1575, %v1585
        %v1592 = vsub.f32 %v1576, %v1588
        %v1593 = vmul.f32 %v1589, 1.442695
        %v1594 = vpow.pop %v1593
        %v1595 = vmul.f32 %v1590, 1.442695
        %v1596 = vpow.pop %v1595
        %v1597 = vmul.f32 %v1591, 1.442695
        %v1598 = vpow.pop %v1597
        %v1599 = vmul.f32 %v1592, 1.442695
        %v1600 = vpow.pop %v1599
        %v1601 = vsel %vm1388, %v1594, 0.0
        %1602 = vadd.xlane.f32.xlu0 %v1601
        %v1603 = vpop.xlane.xlu0 %1602
        %v1604 = vsel %vm1388, %v1596, 0.0
        %1605 = vadd.xlane.f32.xlu0 %v1604
        %v1606 = vpop.xlane.xlu0 %1605
        %v1607 = vsel %vm1388, %v1598, 0.0
        %1608 = vadd.xlane.f32.xlu0 %v1607
        %v1609 = vpop.xlane.xlu0 %1608
        %v1610 = vsel %vm1388, %v1600, 0.0
        %1611 = vadd.xlane.f32.xlu0 %v1610
        %v1612 = vpop.xlane.xlu0 %1611
        %v1613 = vrcp.pop %v1603
        %v1614 = vrcp.pop %v1606
        %v1615 = vrcp.pop %v1609
        %v1616 = vrcp.pop %v1612
        %v1617 = vmul.f32 %v1594, %v1613
        %v1618 = vmul.f32 %v1596, %v1614
        %v1619 = vmul.f32 %v1598, %v1615
        %v1620 = vmul.f32 %v1600, %v1616
        %v1621 = vpack.c.bf16 %v1617, %v1617
        %v1622 = vpack.c.bf16 %v1618, %v1618
        %v1623 = vpack.c.bf16 %v1619, %v1619
        %v1624 = vpack.c.bf16 %v1620, %v1620
        %v1625 = vpack.c.bf16 %v1219, %v1219
        %v1626 = vpack.c.bf16 %v1271, %v1271
        %v1627 = vpack.c.bf16 %v1323, %v1323
        %v1628 = vpack.c.bf16 %v1375, %v1375
        %v1630 = vsel %vm1388, %v1621, 0
        %vm1632 = vcmask 1043456
        %v1634 = vsel %vm1632, %v1625, 0
        %1636 = vmatprep.subr.bf16.mxu0 0
        %1637 = vmatpush1.bf16.msra.mxu0 %v1634
        %1638 = vmatprep.subr.bf16.mxu0 0
        %1639 = vmatpush1.bf16.msra.mxu0 0
        %1640 = vmatprep.subr.bf16.mxu0 0
        %1641 = vmatpush1.bf16.msra.mxu0 0
        %1642 = vmatprep.subr.bf16.mxu0 0
        %1643 = vmatpush1.bf16.msra.mxu0 0
        %1644 = vmatprep.subr.bf16.mxu0 0
        %1645 = vmatpush1.bf16.msra.mxu0 0
        %1646 = vmatprep.subr.bf16.mxu0 0
        %1647 = vmatpush1.bf16.msra.mxu0 0
        %1648 = vmatprep.subr.bf16.mxu0 0
        %1649 = vmatpush1.bf16.msra.mxu0 0
        %1650 = vmatprep.subr.bf16.mxu0 0
        %1651 = vmatpush1.bf16.msra.mxu0 0
        %1652 = vmatprep.subr.bf16.mxu0 0
        %1653 = vmatpush1.bf16.msra.mxu0 0
        %1654 = vmatprep.subr.bf16.mxu0 0
        %1655 = vmatpush1.bf16.msra.mxu0 0
        %1656 = vmatprep.subr.bf16.mxu0 0
        %1657 = vmatpush1.bf16.msra.mxu0 0
        %1658 = vmatprep.subr.bf16.mxu0 0
        %1659 = vmatpush1.bf16.msra.mxu0 0
        %1660 = vmatprep.subr.bf16.mxu0 0
        %1661 = vmatpush1.bf16.msra.mxu0 0
        %1662 = vmatprep.subr.bf16.mxu0 0
        %1663 = vmatpush1.bf16.msra.mxu0 0
        %1664 = vmatprep.subr.bf16.mxu0 0
        %1665 = vmatpush1.bf16.msra.mxu0 0
        %1666 = vmatprep.subr.bf16.mxu0 0
        %1667 = vmatpush1.bf16.msra.mxu0 0
        %1668 = vmatprep.mubr.bf16.mxu0 0
        %1669 = vmatmul.mubr.bf16.gmra.mrb[0].mxu0 %v1630
        %v1670 = vpop.f32.mrb[0].mxu0
        %v1671 = vadd.f32 0.0, %v1670
        %v1672 = vpop.f32.mrb[0].mxu0
        %v1673 = vpop.f32.mrb[0].mxu0
        %v1674 = vpop.f32.mrb[0].mxu0
        %1675 = vdwg.mxu0
        %v1677 = vsel %vm1388, %v1622, 0
        %v1680 = vsel %vm1632, %v1626, 0
        %1682 = vmatprep.subr.bf16.mxu0 0
        %1683 = vmatpush1.bf16.msra.mxu0 %v1680
        %1684 = vmatprep.subr.bf16.mxu0 0
        %1685 = vmatpush1.bf16.msra.mxu0 0
        %1686 = vmatprep.subr.bf16.mxu0 0
        %1687 = vmatpush1.bf16.msra.mxu0 0
        %1688 = vmatprep.subr.bf16.mxu0 0
        %1689 = vmatpush1.bf16.msra.mxu0 0
        %1690 = vmatprep.subr.bf16.mxu0 0
        %1691 = vmatpush1.bf16.msra.mxu0 0
        %1692 = vmatprep.subr.bf16.mxu0 0
        %1693 = vmatpush1.bf16.msra.mxu0 0
        %1694 = vmatprep.subr.bf16.mxu0 0
        %1695 = vmatpush1.bf16.msra.mxu0 0
        %1696 = vmatprep.subr.bf16.mxu0 0
        %1697 = vmatpush1.bf16.msra.mxu0 0
        %1698 = vmatprep.subr.bf16.mxu0 0
        %1699 = vmatpush1.bf16.msra.mxu0 0
        %1700 = vmatprep.subr.bf16.mxu0 0
        %1701 = vmatpush1.bf16.msra.mxu0 0
        %1702 = vmatprep.subr.bf16.mxu0 0
        %1703 = vmatpush1.bf16.msra.mxu0 0
        %1704 = vmatprep.subr.bf16.mxu0 0
        %1705 = vmatpush1.bf16.msra.mxu0 0
        %1706 = vmatprep.subr.bf16.mxu0 0
        %1707 = vmatpush1.bf16.msra.mxu0 0
        %1708 = vmatprep.subr.bf16.mxu0 0
        %1709 = vmatpush1.bf16.msra.mxu0 0
        %1710 = vmatprep.subr.bf16.mxu0 0
        %1711 = vmatpush1.bf16.msra.mxu0 0
        %1712 = vmatprep.subr.bf16.mxu0 0
        %1713 = vmatpush1.bf16.msra.mxu0 0
        %1714 = vmatprep.mubr.bf16.mxu0 0
        %1715 = vmatmul.mubr.bf16.gmra.mrb[0].mxu0 %v1677
        %v1716 = vpop.f32.mrb[0].mxu0
        %v1717 = vadd.f32 0.0, %v1716
        %v1718 = vpop.f32.mrb[0].mxu0
        %v1719 = vpop.f32.mrb[0].mxu0
        %v1720 = vpop.f32.mrb[0].mxu0
        %1721 = vdwg.mxu0
        %v1723 = vsel %vm1388, %v1623, 0
        %v1726 = vsel %vm1632, %v1627, 0
        %1728 = vmatprep.subr.bf16.mxu0 0
        %1729 = vmatpush1.bf16.msra.mxu0 %v1726
        %1730 = vmatprep.subr.bf16.mxu0 0
        %1731 = vmatpush1.bf16.msra.mxu0 0
        %1732 = vmatprep.subr.bf16.mxu0 0
        %1733 = vmatpush1.bf16.msra.mxu0 0
        %1734 = vmatprep.subr.bf16.mxu0 0
        %1735 = vmatpush1.bf16.msra.mxu0 0
        %1736 = vmatprep.subr.bf16.mxu0 0
        %1737 = vmatpush1.bf16.msra.mxu0 0
        %1738 = vmatprep.subr.bf16.mxu0 0
        %1739 = vmatpush1.bf16.msra.mxu0 0
        %1740 = vmatprep.subr.bf16.mxu0 0
        %1741 = vmatpush1.bf16.msra.mxu0 0
        %1742 = vmatprep.subr.bf16.mxu0 0
        %1743 = vmatpush1.bf16.msra.mxu0 0
        %1744 = vmatprep.subr.bf16.mxu0 0
        %1745 = vmatpush1.bf16.msra.mxu0 0
        %1746 = vmatprep.subr.bf16.mxu0 0
        %1747 = vmatpush1.bf16.msra.mxu0 0
        %1748 = vmatprep.subr.bf16.mxu0 0
        %1749 = vmatpush1.bf16.msra.mxu0 0
        %1750 = vmatprep.subr.bf16.mxu0 0
        %1751 = vmatpush1.bf16.msra.mxu0 0
        %1752 = vmatprep.subr.bf16.mxu0 0
        %1753 = vmatpush1.bf16.msra.mxu0 0
        %1754 = vmatprep.subr.bf16.mxu0 0
        %1755 = vmatpush1.bf16.msra.mxu0 0
        %1756 = vmatprep.subr.bf16.mxu0 0
        %1757 = vmatpush1.bf16.msra.mxu0 0
        %1758 = vmatprep.subr.bf16.mxu0 0
        %1759 = vmatpush1.bf16.msra.mxu0 0
        %1760 = vmatprep.mubr.bf16.mxu0 0
        %1761 = vmatmul.mubr.bf16.gmra.mrb[0].mxu0 %v1723
        %v1762 = vpop.f32.mrb[0].mxu0
        %v1763 = vadd.f32 0.0, %v1762
        %v1764 = vpop.f32.mrb[0].mxu0
        %v1765 = vpop.f32.mrb[0].mxu0
        %v1766 = vpop.f32.mrb[0].mxu0
        %1767 = vdwg.mxu0
        %v1769 = vsel %vm1388, %v1624, 0
        %v1772 = vsel %vm1632, %v1628, 0
        %1774 = vmatprep.subr.bf16.mxu0 0
        %1775 = vmatpush1.bf16.msra.mxu0 %v1772
        %1776 = vmatprep.subr.bf16.mxu0 0
        %1777 = vmatpush1.bf16.msra.mxu0 0
        %1778 = vmatprep.subr.bf16.mxu0 0
        %1779 = vmatpush1.bf16.msra.mxu0 0
        %1780 = vmatprep.subr.bf16.mxu0 0
        %1781 = vmatpush1.bf16.msra.mxu0 0
        %1782 = vmatprep.subr.bf16.mxu0 0
        %1783 = vmatpush1.bf16.msra.mxu0 0
        %1784 = vmatprep.subr.bf16.mxu0 0
        %1785 = vmatpush1.bf16.msra.mxu0 0
        %1786 = vmatprep.subr.bf16.mxu0 0
        %1787 = vmatpush1.bf16.msra.mxu0 0
        %1788 = vmatprep.subr.bf16.mxu0 0
        %1789 = vmatpush1.bf16.msra.mxu0 0
        %1790 = vmatprep.subr.bf16.mxu0 0
        %1791 = vmatpush1.bf16.msra.mxu0 0
        %1792 = vmatprep.subr.bf16.mxu0 0
        %1793 = vmatpush1.bf16.msra.mxu0 0
        %1794 = vmatprep.subr.bf16.mxu0 0
        %1795 = vmatpush1.bf16.msra.mxu0 0
        %1796 = vmatprep.subr.bf16.mxu0 0
        %1797 = vmatpush1.bf16.msra.mxu0 0
        %1798 = vmatprep.subr.bf16.mxu0 0
        %1799 = vmatpush1.bf16.msra.mxu0 0
        %1800 = vmatprep.subr.bf16.mxu0 0
        %1801 = vmatpush1.bf16.msra.mxu0 0
        %1802 = vmatprep.subr.bf16.mxu0 0
        %1803 = vmatpush1.bf16.msra.mxu0 0
        %1804 = vmatprep.subr.bf16.mxu0 0
        %1805 = vmatpush1.bf16.msra.mxu0 0
        %1806 = vmatprep.mubr.bf16.mxu0 0
        %1807 = vmatmul.mubr.bf16.gmra.mrb[0].mxu0 %v1769
        %v1808 = vpop.f32.mrb[0].mxu0
        %v1809 = vadd.f32 0.0, %v1808
        %v1810 = vpop.f32.mrb[0].mxu0
        %v1811 = vpop.f32.mrb[0].mxu0
        %v1812 = vpop.f32.mrb[0].mxu0
        %1813 = vdwg.mxu0
        %v1814 = vpack.c.bf16 %v1671, %v1671
        %v1815 = vpack.c.bf16 %v1717, %v1717
        %v1816 = vpack.c.bf16 %v1763, %v1763
        %v1817 = vpack.c.bf16 %v1809, %v1809
        %v1818 = vld [vmem:[%s513] sm:$0xf]
        %v1819 = vld [vmem:[%s513 + $0x4] sm:$0xf]
        %v1820 = vld [vmem:[%s513 + $0x8] sm:$0xf]
        %v1821 = vld [vmem:[%s513 + $0xc] sm:$0xf]
        %v1823 = vsel %vm1388, %v1814, 0
        %v1826 = vsel %vm1632, %v1818, 0
        %1828 = vmatprep.subr.bf16.mxu0 0
        %1829 = vmatpush1.bf16.msra.mxu0 %v1826
        %1830 = vmatprep.subr.bf16.mxu0 0
        %1831 = vmatpush1.bf16.msra.mxu0 0
        %1832 = vmatprep.subr.bf16.mxu0 0
        %1833 = vmatpush1.bf16.msra.mxu0 0
        %1834 = vmatprep.subr.bf16.mxu0 0
        %1835 = vmatpush1.bf16.msra.mxu0 0
        %1836 = vmatprep.subr.bf16.mxu0 0
        %1837 = vmatpush1.bf16.msra.mxu0 0
        %1838 = vmatprep.subr.bf16.mxu0 0
        %1839 = vmatpush1.bf16.msra.mxu0 0
        %1840 = vmatprep.subr.bf16.mxu0 0
        %1841 = vmatpush1.bf16.msra.mxu0 0
        %1842 = vmatprep.subr.bf16.mxu0 0
        %1843 = vmatpush1.bf16.msra.mxu0 0
        %1844 = vmatprep.subr.bf16.mxu0 0
        %1845 = vmatpush1.bf16.msra.mxu0 0
        %1846 = vmatprep.subr.bf16.mxu0 0
        %1847 = vmatpush1.bf16.msra.mxu0 0
        %1848 = vmatprep.subr.bf16.mxu0 0
        %1849 = vmatpush1.bf16.msra.mxu0 0
        %1850 = vmatprep.subr.bf16.mxu0 0
        %1851 = vmatpush1.bf16.msra.mxu0 0
        %1852 = vmatprep.subr.bf16.mxu0 0
        %1853 = vmatpush1.bf16.msra.mxu0 0
        %1854 = vmatprep.subr.bf16.mxu0 0
        %1855 = vmatpush1.bf16.msra.mxu0 0
        %1856 = vmatprep.subr.bf16.mxu0 0
        %1857 = vmatpush1.bf16.msra.mxu0 0
        %1858 = vmatprep.subr.bf16.mxu0 0
        %1859 = vmatpush1.bf16.msra.mxu0 0
        %1860 = vmatprep.mubr.bf16.mxu0 0
        %1861 = vmatmul.mubr.bf16.gmra.mrb[0].mxu0 %v1823
        %v1862 = vpop.f32.mrb[0].mxu0
        %v1863 = vadd.f32 0.0, %v1862
        %v1864 = vpop.f32.mrb[0].mxu0
        %v1865 = vpop.f32.mrb[0].mxu0
        %v1866 = vpop.f32.mrb[0].mxu0
        %1867 = vdwg.mxu0
        %v1869 = vsel %vm1388, %v1815, 0
        %v1872 = vsel %vm1632, %v1819, 0
        %1874 = vmatprep.subr.bf16.mxu0 0
        %1875 = vmatpush1.bf16.msra.mxu0 %v1872
        %1876 = vmatprep.subr.bf16.mxu0 0
        %1877 = vmatpush1.bf16.msra.mxu0 0
        %1878 = vmatprep.subr.bf16.mxu0 0
        %1879 = vmatpush1.bf16.msra.mxu0 0
        %1880 = vmatprep.subr.bf16.mxu0 0
        %1881 = vmatpush1.bf16.msra.mxu0 0
        %1882 = vmatprep.subr.bf16.mxu0 0
        %1883 = vmatpush1.bf16.msra.mxu0 0
        %1884 = vmatprep.subr.bf16.mxu0 0
        %1885 = vmatpush1.bf16.msra.mxu0 0
        %1886 = vmatprep.subr.bf16.mxu0 0
        %1887 = vmatpush1.bf16.msra.mxu0 0
        %1888 = vmatprep.subr.bf16.mxu0 0
        %1889 = vmatpush1.bf16.msra.mxu0 0
        %1890 = vmatprep.subr.bf16.mxu0 0
        %1891 = vmatpush1.bf16.msra.mxu0 0
        %1892 = vmatprep.subr.bf16.mxu0 0
        %1893 = vmatpush1.bf16.msra.mxu0 0
        %1894 = vmatprep.subr.bf16.mxu0 0
        %1895 = vmatpush1.bf16.msra.mxu0 0
        %1896 = vmatprep.subr.bf16.mxu0 0
        %1897 = vmatpush1.bf16.msra.mxu0 0
        %1898 = vmatprep.subr.bf16.mxu0 0
        %1899 = vmatpush1.bf16.msra.mxu0 0
        %1900 = vmatprep.subr.bf16.mxu0 0
        %1901 = vmatpush1.bf16.msra.mxu0 0
        %1902 = vmatprep.subr.bf16.mxu0 0
        %1903 = vmatpush1.bf16.msra.mxu0 0
        %1904 = vmatprep.subr.bf16.mxu0 0
        %1905 = vmatpush1.bf16.msra.mxu0 0
        %1906 = vmatprep.mubr.bf16.mxu0 0
        %1907 = vmatmul.mubr.bf16.gmra.mrb[0].mxu0 %v1869
        %v1908 = vpop.f32.mrb[0].mxu0
        %v1909 = vadd.f32 0.0, %v1908
        %v1910 = vpop.f32.mrb[0].mxu0
        %v1911 = vpop.f32.mrb[0].mxu0
        %v1912 = vpop.f32.mrb[0].mxu0
        %1913 = vdwg.mxu0
        %v1915 = vsel %vm1388, %v1816, 0
        %v1918 = vsel %vm1632, %v1820, 0
        %1920 = vmatprep.subr.bf16.mxu0 0
        %1921 = vmatpush1.bf16.msra.mxu0 %v1918
        %1922 = vmatprep.subr.bf16.mxu0 0
        %1923 = vmatpush1.bf16.msra.mxu0 0
        %1924 = vmatprep.subr.bf16.mxu0 0
        %1925 = vmatpush1.bf16.msra.mxu0 0
        %1926 = vmatprep.subr.bf16.mxu0 0
        %1927 = vmatpush1.bf16.msra.mxu0 0
        %1928 = vmatprep.subr.bf16.mxu0 0
        %1929 = vmatpush1.bf16.msra.mxu0 0
        %1930 = vmatprep.subr.bf16.mxu0 0
        %1931 = vmatpush1.bf16.msra.mxu0 0
        %1932 = vmatprep.subr.bf16.mxu0 0
        %1933 = vmatpush1.bf16.msra.mxu0 0
        %1934 = vmatprep.subr.bf16.mxu0 0
        %1935 = vmatpush1.bf16.msra.mxu0 0
        %1936 = vmatprep.subr.bf16.mxu0 0
        %1937 = vmatpush1.bf16.msra.mxu0 0
        %1938 = vmatprep.subr.bf16.mxu0 0
        %1939 = vmatpush1.bf16.msra.mxu0 0
        %1940 = vmatprep.subr.bf16.mxu0 0
        %1941 = vmatpush1.bf16.msra.mxu0 0
        %1942 = vmatprep.subr.bf16.mxu0 0
        %1943 = vmatpush1.bf16.msra.mxu0 0
        %1944 = vmatprep.subr.bf16.mxu0 0
        %1945 = vmatpush1.bf16.msra.mxu0 0
        %1946 = vmatprep.subr.bf16.mxu0 0
        %1947 = vmatpush1.bf16.msra.mxu0 0
        %1948 = vmatprep.subr.bf16.mxu0 0
        %1949 = vmatpush1.bf16.msra.mxu0 0
        %1950 = vmatprep.subr.bf16.mxu0 0
        %1951 = vmatpush1.bf16.msra.mxu0 0
        %1952 = vmatprep.mubr.bf16.mxu0 0
        %1953 = vmatmul.mubr.bf16.gmra.mrb[0].mxu0 %v1915
        %v1954 = vpop.f32.mrb[0].mxu0
        %v1955 = vadd.f32 0.0, %v1954
        %v1956 = vpop.f32.mrb[0].mxu0
        %v1957 = vpop.f32.mrb[0].mxu0
        %v1958 = vpop.f32.mrb[0].mxu0
        %1959 = vdwg.mxu0
        %v1961 = vsel %vm1388, %v1817, 0
        %v1964 = vsel %vm1632, %v1821, 0
        %1966 = vmatprep.subr.bf16.mxu0 0
        %1967 = vmatpush1.bf16.msra.mxu0 %v1964
        %1968 = vmatprep.subr.bf16.mxu0 0
        %1969 = vmatpush1.bf16.msra.mxu0 0
        %1970 = vmatprep.subr.bf16.mxu0 0
        %1971 = vmatpush1.bf16.msra.mxu0 0
        %1972 = vmatprep.subr.bf16.mxu0 0
        %1973 = vmatpush1.bf16.msra.mxu0 0
        %1974 = vmatprep.subr.bf16.mxu0 0
        %1975 = vmatpush1.bf16.msra.mxu0 0
        %1976 = vmatprep.subr.bf16.mxu0 0
        %1977 = vmatpush1.bf16.msra.mxu0 0
        %1978 = vmatprep.subr.bf16.mxu0 0
        %1979 = vmatpush1.bf16.msra.mxu0 0
        %1980 = vmatprep.subr.bf16.mxu0 0
        %1981 = vmatpush1.bf16.msra.mxu0 0
        %1982 = vmatprep.subr.bf16.mxu0 0
        %1983 = vmatpush1.bf16.msra.mxu0 0
        %1984 = vmatprep.subr.bf16.mxu0 0
        %1985 = vmatpush1.bf16.msra.mxu0 0
        %1986 = vmatprep.subr.bf16.mxu0 0
        %1987 = vmatpush1.bf16.msra.mxu0 0
        %1988 = vmatprep.subr.bf16.mxu0 0
        %1989 = vmatpush1.bf16.msra.mxu0 0
        %1990 = vmatprep.subr.bf16.mxu0 0
        %1991 = vmatpush1.bf16.msra.mxu0 0
        %1992 = vmatprep.subr.bf16.mxu0 0
        %1993 = vmatpush1.bf16.msra.mxu0 0
        %1994 = vmatprep.subr.bf16.mxu0 0
        %1995 = vmatpush1.bf16.msra.mxu0 0
        %1996 = vmatprep.subr.bf16.mxu0 0
        %1997 = vmatpush1.bf16.msra.mxu0 0
        %1998 = vmatprep.mubr.bf16.mxu0 0
        %1999 = vmatmul.mubr.bf16.gmra.mrb[0].mxu0 %v1961
        %v2000 = vpop.f32.mrb[0].mxu0
        %v2001 = vadd.f32 0.0, %v2000
        %v2002 = vpop.f32.mrb[0].mxu0
        %v2003 = vpop.f32.mrb[0].mxu0
        %v2004 = vpop.f32.mrb[0].mxu0
        %2005 = vdwg.mxu0
        %v2006 = vsel %vm617, %v1863, 0.0
        %v2007 = vsel %vm617, %v1909, 0.0
        %v2008 = vadd.f32 %v2006, %v2007
        %v2009 = vsel %vm617, %v1955, 0.0
        %v2010 = vadd.f32 %v2008, %v2009
        %v2011 = vsel %vm617, %v2001, 0.0
        %v2012 = vadd.f32 %v2010, %v2011
        %v2013 = vlaneseq
        %v2014 = vshrl.u32 %v2013, 7
        %v2015 = vsub.s32 2, %v2014
        %v2016 = vrot.slane %v538, %v2015
        %v2017 = vadd.f32 %v2012, %v2016
        %v2018 = vlaneseq
        %v2019 = vshrl.u32 %v2018, 7
        %v2020 = vsub.s32 3, %v2019
        %v2021 = vrot.slane %v538, %v2020
        %v2022 = vmul.f32 %v2017, %v2021
        %v2023 = vadd.f32 %v2022, %v537
        %v2024 = vsel %vm617, %v2023, 0.0
        %2025 = vadd.xlane.f32.xlu0 %v2024
        %v2026 = vpop.xlane.xlu0 %2025
        %v2027 = vmul.f32 %v2026, %v621
        %v2028 = vmul.f32 %v2023, %v2023
        %v2029 = vsel %vm617, %v2028, 0.0
        %2030 = vadd.xlane.f32.xlu0 %v2029
        %v2031 = vpop.xlane.xlu0 %2030
        %v2032 = vmul.f32 %v2031, %v621
        %v2033 = vmul.f32 %v2027, %v2027
        %v2034 = vsub.f32 %v2032, %v2033
        %v2035 = vsub.f32 %v2023, %v2027
        %v2036 = vadd.f32 %v2034, 1e-06
        %v2037 = vrsqrt.pop %v2036
        %v2038 = vmul.f32 %v2035, %v2037
        %v2039 = vlaneseq
        %v2040 = vshrl.u32 %v2039, 7
        %v2041 = vsub.s32 4, %v2040
        %v2042 = vrot.slane %v538, %v2041
        %v2043 = vmul.f32 %v2038, %v2042
        %v2044 = vlaneseq
        %v2045 = vshrl.u32 %v2044, 7
        %v2046 = vsub.s32 5, %v2045
        %v2047 = vrot.slane %v538, %v2046
        %v2048 = vadd.f32 %v2043, %v2047
        %v2049 = vpack.c.bf16 %v2048, %v2048
        %v2050 = vld [vmem:[%s518] sm:$0xf]
        %v2051 = vld [vmem:[%s518 + $0x4] sm:$0xf]
        %v2052 = vld [vmem:[%s518 + $0x8] sm:$0xf]
        %v2053 = vld [vmem:[%s518 + $0xc] sm:$0xf]
        %v2054 = vld [vmem:[%s493] sm:$0x1]
        %v2056 = vlaneseq
        %v2057 = vshrl.u32 %v2056, 7
        %v2058 = vsub.s32 0, %v2057
        %v2059 = vrot.slane %v2054, %v2058
        %v2065 = vunpack.c.l.b16 %v2050
        %v2066 = vunpack.c.l.b16 %v2051
        %v2067 = vunpack.c.l.b16 %v2052
        %v2068 = vunpack.c.l.b16 %v2053
        %v2069 = vpack.c.b16 %v2066, %v2065
        %v2070 = vpack.c.b16 %v2068, %v2067
        %v2074 = vsel %vm617, %v2049, 0
        %2076 = vmatprep.subr.bf16.mxu0 0
        %2077 = vmatpush1.bf16.msra.mxu0 %v2069
        %2078 = vmatprep.subr.bf16.mxu0 0
        %2079 = vmatpush1.bf16.msra.mxu0 %v2070
        %2080 = vmatprep.subr.bf16.mxu0 0
        %2081 = vmatpush1.bf16.msra.mxu0 0
        %2082 = vmatprep.subr.bf16.mxu0 0
        %2083 = vmatpush1.bf16.msra.mxu0 0
        %2084 = vmatprep.subr.bf16.mxu0 0
        %2085 = vmatpush1.bf16.msra.mxu0 0
        %2086 = vmatprep.subr.bf16.mxu0 0
        %2087 = vmatpush1.bf16.msra.mxu0 0
        %2088 = vmatprep.subr.bf16.mxu0 0
        %2089 = vmatpush1.bf16.msra.mxu0 0
        %2090 = vmatprep.subr.bf16.mxu0 0
        %2091 = vmatpush1.bf16.msra.mxu0 0
        %2092 = vmatprep.subr.bf16.mxu0 0
        %2093 = vmatpush1.bf16.msra.mxu0 0
        %2094 = vmatprep.subr.bf16.mxu0 0
        %2095 = vmatpush1.bf16.msra.mxu0 0
        %2096 = vmatprep.subr.bf16.mxu0 0
        %2097 = vmatpush1.bf16.msra.mxu0 0
        %2098 = vmatprep.subr.bf16.mxu0 0
        %2099 = vmatpush1.bf16.msra.mxu0 0
        %2100 = vmatprep.subr.bf16.mxu0 0
        %2101 = vmatpush1.bf16.msra.mxu0 0
        %2102 = vmatprep.subr.bf16.mxu0 0
        %2103 = vmatpush1.bf16.msra.mxu0 0
        %2104 = vmatprep.subr.bf16.mxu0 0
        %2105 = vmatpush1.bf16.msra.mxu0 0
        %2106 = vmatprep.subr.bf16.mxu0 0
        %2107 = vmatpush1.bf16.msra.mxu0 0
        %2108 = vmatprep.mubr.bf16.mxu0 0
        %2109 = vmatmul.mubr.bf16.gmra.mrb[0].mxu0 %v2074
        %v2110 = vpop.f32.mrb[0].mxu0
        %v2111 = vadd.f32 %v2059, %v2110
        %v2112 = vpop.f32.mrb[0].mxu0
        %v2113 = vpop.f32.mrb[0].mxu0
        %v2114 = vpop.f32.mrb[0].mxu0
        %2115 = vdwg.mxu0
        %v2116 = vmul.f32 %v2111, 0.5
        %v2117 = vmul.f32 %v2111, 0.70710677
        %v2118 = verf.f32.pop %v2117
        %v2119 = vadd.f32 %v2118, 1.0
        %v2120 = vmul.f32 %v2116, %v2119
        %v2121 = vpack.c.bf16 %v2120, %v2120
        %v2122 = vld [vmem:[%s523] sm:$0xf]
        %v2123 = vld [vmem:[%s523 + $0x4] sm:$0xf]
        %v2124 = vld [vmem:[%s523 + $0x8] sm:$0xf]
        %v2125 = vld [vmem:[%s523 + $0xc] sm:$0xf]
        %v2126 = vld [vmem:[%s523 + $0x10] sm:$0xf]
        %v2127 = vld [vmem:[%s523 + $0x14] sm:$0xf]
        %v2128 = vld [vmem:[%s523 + $0x18] sm:$0xf]
        %v2129 = vld [vmem:[%s523 + $0x1c] sm:$0xf]
        %v2130 = vlaneseq
        %v2131 = vshrl.u32 %v2130, 7
        %v2132 = vsub.s32 6, %v2131
        %v2133 = vrot.slane %v538, %v2132
        %v2142 = vunpack.c.l.b16 %v2122
        %v2143 = vunpack.c.l.b16 %v2123
        %v2144 = vunpack.c.l.b16 %v2124
        %v2145 = vunpack.c.l.b16 %v2125
        %v2146 = vunpack.c.l.b16 %v2126
        %v2147 = vunpack.c.l.b16 %v2127
        %v2148 = vunpack.c.l.b16 %v2128
        %v2149 = vunpack.c.l.b16 %v2129
        %v2150 = vpack.c.b16 %v2143, %v2142
        %v2151 = vpack.c.b16 %v2145, %v2144
        %v2152 = vpack.c.b16 %v2147, %v2146
        %v2153 = vpack.c.b16 %v2149, %v2148
        %vm2158 = vcmask 523264
        %v2160 = vsel %vm2158, %v2121, 0
        %2162 = vmatprep.subr.bf16.mxu0 0
        %2163 = vmatpush1.bf16.msra.mxu0 %v2150
        %2164 = vmatprep.subr.bf16.mxu0 0
        %2165 = vmatpush1.bf16.msra.mxu0 %v2151
        %2166 = vmatprep.subr.bf16.mxu0 0
        %2167 = vmatpush1.bf16.msra.mxu0 %v2152
        %2168 = vmatprep.subr.bf16.mxu0 0
        %2169 = vmatpush1.bf16.msra.mxu0 %v2153
        %2170 = vmatprep.subr.bf16.mxu0 0
        %2171 = vmatpush1.bf16.msra.mxu0 0
        %2172 = vmatprep.subr.bf16.mxu0 0
        %2173 = vmatpush1.bf16.msra.mxu0 0
        %2174 = vmatprep.subr.bf16.mxu0 0
        %2175 = vmatpush1.bf16.msra.mxu0 0
        %2176 = vmatprep.subr.bf16.mxu0 0
        %2177 = vmatpush1.bf16.msra.mxu0 0
        %2178 = vmatprep.subr.bf16.mxu0 0
        %2179 = vmatpush1.bf16.msra.mxu0 0
        %2180 = vmatprep.subr.bf16.mxu0 0
        %2181 = vmatpush1.bf16.msra.mxu0 0
        %2182 = vmatprep.subr.bf16.mxu0 0
        %2183 = vmatpush1.bf16.msra.mxu0 0
        %2184 = vmatprep.subr.bf16.mxu0 0
        %2185 = vmatpush1.bf16.msra.mxu0 0
        %2186 = vmatprep.subr.bf16.mxu0 0
        %2187 = vmatpush1.bf16.msra.mxu0 0
        %2188 = vmatprep.subr.bf16.mxu0 0
        %2189 = vmatpush1.bf16.msra.mxu0 0
        %2190 = vmatprep.subr.bf16.mxu0 0
        %2191 = vmatpush1.bf16.msra.mxu0 0
        %2192 = vmatprep.subr.bf16.mxu0 0
        %2193 = vmatpush1.bf16.msra.mxu0 0
        %2194 = vmatprep.mubr.bf16.mxu0 0
        %2195 = vmatmul.mubr.bf16.gmra.mrb[0].mxu0 %v2160
        %v2196 = vpop.f32.mrb[0].mxu0
        %v2197 = vadd.f32 %v2133, %v2196
        %v2198 = vpop.f32.mrb[0].mxu0
        %v2199 = vpop.f32.mrb[0].mxu0
        %v2200 = vpop.f32.mrb[0].mxu0
        %2201 = vdwg.mxu0
        %v2202 = vlaneseq
        %v2203 = vshrl.u32 %v2202, 7
        %v2204 = vsub.s32 7, %v2203
        %v2205 = vrot.slane %v538, %v2204
        %v2206 = vmul.f32 %v2197, %v2205
        %v2207 = vadd.f32 %v2206, %v2023
        %2208 = vst.msk [vmem:[%s536] sm:$0xff] %vm617, %v2207
        // Predicated region
        $region69: #{encoder_forward.1} parent=59 // pred_check
          %p2209 = pneg %p303
        $region70: #{encoder_forward.1} parent=59 // pred_check_branch
          %2211 = sbr.rel (%p2209) target = $region72
        $region71: #{encoder_forward.1} parent=59 // pred_region
          %s2213 = ssub.s32 256, 256
          %2214 = vsyncadd [#allocation4], %s2213
          %s2215 = sshll.u32 [#allocation5], 4
          %s2216 = int_to_ptr.vmem [resolvable:$true] %s2215
          %2221 = dma.vmem_to_hbm [thread:$0]  %s2216, 256, %s10, [#allocation4], 128, 128, 8
        $region72: #{encoder_forward.1} parent=59 // pred_fallthru
          _
        // Predicated region
        $region73: #{encoder_forward.1} parent=59 // pred_check
          %p2222 = pneg %p303
        $region74: #{encoder_forward.1} parent=59 // pred_check_branch
          %2224 = sbr.rel (%p2222) target = $region76
        $region75: #{encoder_forward.1} parent=59 // pred_region
          %2225 = dma.done [#allocation4], 256
        $region76: #{encoder_forward.1} parent=59 // pred_fallthru
          _
      $region60: #{encoder_forward.1} parent=5 // pred_fallthru
        _
      %p2226 = scmp.le.s32.totalorder 2, %s18
      // Predicated region
      $region77: #{encoder_forward.1} parent=5 // pred_check
        %p2227 = pneg %p2226
      $region78: #{encoder_forward.1} parent=5 // pred_check_branch
        %2229 = sbr.rel (%p2227) target = $region80
      $region79: #{encoder_forward.1} parent=5 // pred_region
        %s2230 = ssub.s32 %s18, 2
      $region80: #{encoder_forward.1} parent=5 // pred_fallthru
        _
    $region6: #{encoder_forward.1} parent=1 // loop_footer
      %s22 = sadd.s32 1, %s18
    $region7: #{encoder_forward.1} parent=1 // loop_footer_branch
      %17 = sbr.rel target = $region3
    $region8: #{encoder_forward.1} parent=1 // loop_exit
      _
    %2231 = vsyncpa [#allocation3], 1
    %s2232 = scalar_lea.sflag [#allocation3], 1
    %2233 = vsyncpa %s2232, 1
    %2234 = vsyncpa [#allocation4], 1
    %s2235 = scalar_lea.sflag [#allocation4], 1
    %2236 = vsyncpa %s2235, 1

</llo_original>
